<compile_context>
chip_gen: v6e
topology: v6e:2x2x1
jax: 0.10.0
libtpu: 0.0.40
codegen_flags: <defaults>
</compile_context>

<pallas_src>
import functools

import jax
import jax.numpy as jnp
from jax.experimental import pallas as pl
from jax.experimental.pallas import tpu as pltpu


def _round_up(x, m):
    return ((x + m - 1) // m) * m


# --------------------------------------------------------------------------
# Fused encoder kernel: conv-as-matmul + ReLU + GAP + fc + MLP head + L2 norm
#   grid = (num_batch_blocks,)  — each step handles BB images end-to-end.
# --------------------------------------------------------------------------
def _pico_fused_kernel(p_ref,                      # [BB*H*W, K_PAD] bf16 patches
                       wc_ref, bc_ref,             # conv weight / bias
                       wcat_ref, bcat_ref,         # [fc | h1] fused head
                       wh2_ref, bh2_ref,           # head layer 2
                       logits_ref, q_ref,          # (BB, 128) outputs
                       *, BB, HW, inv_hw):
    # --- conv-as-matmul over the whole batch block (bf16 MXU, f32 acc) -----
    act = jnp.dot(p_ref[...], wc_ref[...],
                  preferred_element_type=jnp.float32)          # [BB*HW, C] f32
    act = jnp.maximum(act + bc_ref[...], 0.0)

    # --- global average pool: per-image cross-sublane sum (XLU, not MXU) ---
    feat = jnp.sum(act.reshape(BB, HW, act.shape[-1]), axis=1) * inv_hw  # [BB, C]

    # --- fc + first MLP layer as one concatenated matmul -------------------
    ncp = logits_ref.shape[1]
    y = jnp.dot(feat, wcat_ref[...],
                preferred_element_type=jnp.float32) + bcat_ref[...]      # [BB, ncp+C]
    logits_ref[...] = y[:, :ncp]                                         # padded cols are 0

    # --- MLP head layer 2 + L2 normalize ------------------------------------
    h = jnp.maximum(y[:, ncp:], 0.0)                                     # [BB, C]
    z = jnp.dot(h, wh2_ref[...],
                preferred_element_type=jnp.float32) + bh2_ref[...]       # [BB, ld_pad]
    sumsq = jnp.sum(z * z, axis=-1, keepdims=True)
    # F.normalize(z, eps=1e-12)  ==  z * rsqrt(max(||z||^2, 1e-24))
    q_ref[...] = z * jax.lax.rsqrt(jnp.maximum(sumsq, 1e-24))


# --------------------------------------------------------------------------
# PiCO module with a small synthetic encoder_q
# --------------------------------------------------------------------------
class PiCOPallas:
    BB = 8  # images per grid step (sublane-dense output blocks)

    def __init__(self, num_class=8, low_dim=16, dim_in=32, cin=3, seed=0):
        self.num_class, self.low_dim = num_class, low_dim
        self.dim_in, self.cin = dim_in, cin
        kkc = 9 * cin
        s = 0.1
        ks = jax.random.split(jax.random.PRNGKey(seed), 6)

        # raw (reference) parameters, f32; conv weight rows ordered (kh, kw, cin)
        self.w_conv = (s * jax.random.normal(ks[0], (kkc, dim_in))).astype(jnp.float32)
        self.b_conv = jnp.zeros((dim_in,), jnp.float32)
        self.w_fc = (s * jax.random.normal(ks[1], (dim_in, num_class))).astype(jnp.float32)
        self.b_fc = (s * jax.random.normal(ks[2], (num_class,))).astype(jnp.float32)
        self.w_h1 = (s * jax.random.normal(ks[3], (dim_in, dim_in))).astype(jnp.float32)
        self.b_h1 = jnp.zeros((dim_in,), jnp.float32)
        self.w_h2 = (s * jax.random.normal(ks[4], (dim_in, low_dim))).astype(jnp.float32)
        self.b_h2 = jnp.zeros((low_dim,), jnp.float32)

        # kernel-layout parameters: K padded, lane-dense (128-wide) heads
        self.k_pad = _round_up(kkc, 32)
        self.nc_pad = _round_up(num_class, 128)
        self.ld_pad = _round_up(low_dim, 128)

        wcp = jnp.zeros((self.k_pad, dim_in), jnp.float32).at[:kkc].set(self.w_conv)
        self.w_conv_p = wcp.astype(jnp.bfloat16)                          # [K_PAD, C] bf16
        self.b_conv_p = self.b_conv[None, :]                              # [1, C] f32

        w_fc_p = jnp.zeros((dim_in, self.nc_pad), jnp.float32).at[:, :num_class].set(self.w_fc)
        b_fc_p = jnp.zeros((self.nc_pad,), jnp.float32).at[:num_class].set(self.b_fc)
        self.w_cat = jnp.concatenate([w_fc_p, self.w_h1], axis=1)         # [C, NCp+C]
        self.b_cat = jnp.concatenate([b_fc_p, self.b_h1])[None, :]        # [1, NCp+C]

        self.w_h2_p = jnp.zeros((dim_in, self.ld_pad), jnp.float32).at[:, :low_dim].set(self.w_h2)
        self.b_h2_p = jnp.zeros((1, self.ld_pad), jnp.float32).at[0, :low_dim].set(self.b_h2)

    # ---------------- wrapper-side im2col (bf16, K padded) ----------------
    def _make_patches(self, img_q, b_pad):
        B, Cin, H, W = img_q.shape
        x = jnp.transpose(img_q.astype(jnp.float32), (0, 2, 3, 1))        # NHWC
        xp = jnp.pad(x, ((0, 0), (1, 1), (1, 1), (0, 0)))
        cols = [xp[:, dh:dh + H, dw:dw + W, :]
                for dh in range(3) for dw in range(3)]
        patches = jnp.concatenate(cols, axis=-1)                          # [B,H,W,9*Cin]
        patches = jnp.pad(patches,
                          ((0, b_pad - B), (0, 0), (0, 0),
                           (0, self.k_pad - 9 * Cin)))
        return patches.reshape(b_pad * H * W, self.k_pad).astype(jnp.bfloat16)

    # ---------------- Pallas encoder ----------------
    def _encoder_q(self, img_q):
        B, Cin, H, W = img_q.shape
        assert Cin == self.cin
        C = self.dim_in
        BB = self.BB
        b_pad = _round_up(B, BB)
        nblk = b_pad // BB
        HW = H * W
        M = BB * HW

        patches = self._make_patches(img_q, b_pad)                        # [b_pad*HW, K_PAD]

        kernel = functools.partial(_pico_fused_kernel,
                                   BB=BB, HW=HW, inv_hw=1.0 / float(HW))

        flops = (2 * b_pad * HW * self.k_pad * C
                 + 2 * b_pad * C * (self.nc_pad + C)
                 + 2 * b_pad * C * self.ld_pad)
        bytes_acc = (patches.size * 2
                     + self.w_conv_p.size * 2
                     + (self.w_cat.size + self.w_h2_p.size) * 4
                     + b_pad * (self.nc_pad + self.ld_pad) * 4)

        logits_p, q_p = pl.pallas_call(
            kernel,
            out_shape=(
                jax.ShapeDtypeStruct((b_pad, self.nc_pad), jnp.float32),
                jax.ShapeDtypeStruct((b_pad, self.ld_pad), jnp.float32),
            ),
            grid=(nblk,),
            in_specs=[
                pl.BlockSpec((M, self.k_pad), lambda i: (i, 0)),
                pl.BlockSpec((self.k_pad, C), lambda i: (0, 0)),
                pl.BlockSpec((1, C), lambda i: (0, 0)),
                pl.BlockSpec((C, self.nc_pad + C), lambda i: (0, 0)),
                pl.BlockSpec((1, self.nc_pad + C), lambda i: (0, 0)),
                pl.BlockSpec((C, self.ld_pad), lambda i: (0, 0)),
                pl.BlockSpec((1, self.ld_pad), lambda i: (0, 0)),
            ],
            out_specs=(
                pl.BlockSpec((BB, self.nc_pad), lambda i: (i, 0)),
                pl.BlockSpec((BB, self.ld_pad), lambda i: (i, 0)),
            ),
            compiler_params=pltpu.CompilerParams(
                dimension_semantics=("parallel",)),
            cost_estimate=pl.CostEstimate(
                flops=flops, transcendentals=b_pad, bytes_accessed=bytes_acc),
        )(patches, self.w_conv_p, self.b_conv_p,
          self.w_cat, self.b_cat, self.w_h2_p, self.b_h2_p)

        return logits_p[:B, :self.num_class], q_p[:B, :self.low_dim]

    # ---------------- PiCO API ----------------
    def forward(self, img_q, args=None, eval_only=False):
        output, _ = self._encoder_q(img_q)
        return output

    def predict(self, img_q, args=None, eval_only=False):
        _, q = self._encoder_q(img_q)
        return q

    # ---------------- pure-JAX reference (f32) ----------------
    def _reference(self, img_q):
        B, Cin, H, W = img_q.shape
        x = jnp.transpose(img_q.astype(jnp.float32), (0, 2, 3, 1))
        xpad = jnp.pad(x, ((0, 0), (1, 1), (1, 1), (0, 0)))
        wk = self.w_conv.reshape(3, 3, Cin, self.dim_in)
        act = jnp.zeros((B, H, W, self.dim_in), jnp.float32)
        for dh in range(3):
            for dw in range(3):
                act = act + jnp.einsum('bhwc,cd->bhwd',
                                       xpad[:, dh:dh + H, dw:dw + W, :], wk[dh, dw])
        act = jnp.maximum(act + self.b_conv, 0.0)
        feat = act.mean(axis=(1, 2))
        logits = feat @ self.w_fc + self.b_fc
        h = jnp.maximum(feat @ self.w_h1 + self.b_h1, 0.0)
        z = h @ self.w_h2 + self.b_h2
        nrm = jnp.maximum(jnp.linalg.norm(z, axis=-1, keepdims=True), 1e-12)
        return logits, z / nrm


if __name__ == "__main__":
    key = jax.random.PRNGKey(0)
    B, Cin, H, W = 2, 3, 16, 16
    img_q = jax.random.normal(key, (B, Cin, H, W), dtype=jnp.float32)

    model = PiCOPallas(num_class=8, low_dim=16, dim_in=32, cin=Cin, seed=0)

    output = model.forward(img_q)        # PiCO.forward -> classifier logits
    q = model.predict(img_q)             # PiCO.predict -> normalized feature
    jax.block_until_ready((output, q))

    assert output.shape == (B, 8)
    assert q.shape == (B, 16)
    # q rows are L2-normalized
    assert bool(jnp.allclose(jnp.linalg.norm(q, axis=-1), 1.0, atol=1e-3))
    # matches the pure-JAX f32 reference (bf16 MXU operands -> loose tol)
    ref_logits, ref_q = model._reference(img_q)
    assert bool(jnp.allclose(output, ref_logits, atol=3e-2, rtol=3e-2))
    assert bool(jnp.allclose(q, ref_q, atol=3e-2, rtol=3e-2))
    print("KERNEL_OK")
</pallas_src>

<mosaic_0001>
module attributes {stable_mosaic.version = 11 : i64} {
  func.func @_pico_fused_kernel(%arg0: i32, %arg1: memref<2048x32xbf16, #tpu.memory_space<vmem>>, %arg2: memref<32x32xbf16, #tpu.memory_space<vmem>>, %arg3: memref<1x32xf32, #tpu.memory_space<vmem>>, %arg4: memref<32x160xf32, #tpu.memory_space<vmem>>, %arg5: memref<1x160xf32, #tpu.memory_space<vmem>>, %arg6: memref<32x128xf32, #tpu.memory_space<vmem>>, %arg7: memref<1x128xf32, #tpu.memory_space<vmem>>, %arg8: memref<8x128xf32, #tpu.memory_space<vmem>>, %arg9: memref<8x128xf32, #tpu.memory_space<vmem>>) attributes {dimension_semantics = [#tpu.dimension_semantics<parallel>], iteration_bounds = array<i64: 1>, scalar_prefetch = 0 : i64, scratch_operands = 0 : i64, tpu.core_type = #tpu.core_type<tc>, window_params = [{transform_indices = @transform_0, window_bounds = array<i64: 2048, 32>}, {pipeline_mode = #tpu.pipeline_mode<synchronous>, transform_indices = @transform_1, window_bounds = array<i64: 32, 32>}, {pipeline_mode = #tpu.pipeline_mode<synchronous>, transform_indices = @transform_2, window_bounds = array<i64: 1, 32>}, {pipeline_mode = #tpu.pipeline_mode<synchronous>, transform_indices = @transform_3, window_bounds = array<i64: 32, 160>}, {pipeline_mode = #tpu.pipeline_mode<synchronous>, transform_indices = @transform_4, window_bounds = array<i64: 1, 160>}, {pipeline_mode = #tpu.pipeline_mode<synchronous>, transform_indices = @transform_5, window_bounds = array<i64: 32, 128>}, {pipeline_mode = #tpu.pipeline_mode<synchronous>, transform_indices = @transform_6, window_bounds = array<i64: 1, 128>}, {transform_indices = @transform_7, window_bounds = array<i64: 8, 128>}, {transform_indices = @transform_8, window_bounds = array<i64: 8, 128>}]} {
    %c0 = arith.constant 0 : index
    %c0_0 = arith.constant 0 : index
    %0 = vector.load %arg1[%c0, %c0_0] : memref<2048x32xbf16, #tpu.memory_space<vmem>>, vector<2048x32xbf16>
    %c0_1 = arith.constant 0 : index
    %c0_2 = arith.constant 0 : index
    %1 = vector.load %arg2[%c0_1, %c0_2] : memref<32x32xbf16, #tpu.memory_space<vmem>>, vector<32x32xbf16>
    %cst = arith.constant dense<0.000000e+00> : vector<2048x32xf32>
    %2 = tpu.matmul %0, %1, %cst {dimension_numbers = #tpu.dot_dimension_numbers<[1], [0], [0], [1], [0, 0, 1, 1], [], []>} : vector<2048x32xbf16>, vector<32x32xbf16>, vector<2048x32xf32> -> vector<2048x32xf32>
    %c0_3 = arith.constant 0 : index
    %c0_4 = arith.constant 0 : index
    %3 = vector.load %arg3[%c0_3, %c0_4] : memref<1x32xf32, #tpu.memory_space<vmem>>, vector<1x32xf32>
    %4 = vector.broadcast %3 : vector<1x32xf32> to vector<2048x32xf32>
    %5 = arith.addf %2, %4 : vector<2048x32xf32>
    %cst_5 = arith.constant 0.000000e+00 : f32
    %6 = vector.broadcast %cst_5 : f32 to vector<2048x32xf32>
    %7 = arith.maximumf %5, %6 : vector<2048x32xf32>
    %8 = vector.shape_cast %7 : vector<2048x32xf32> to vector<8x256x32xf32>
    %cst_6 = arith.constant dense<0.000000e+00> : vector<8x32xf32>
    %9 = vector.multi_reduction <add>, %8, %cst_6 [1] : vector<8x256x32xf32> to vector<8x32xf32>
    %cst_7 = arith.constant 3.906250e-03 : f32
    %10 = vector.broadcast %cst_7 : f32 to vector<8x32xf32>
    %11 = arith.mulf %9, %10 : vector<8x32xf32>
    %c0_8 = arith.constant 0 : index
    %c0_9 = arith.constant 0 : index
    %12 = vector.load %arg4[%c0_8, %c0_9] : memref<32x160xf32, #tpu.memory_space<vmem>>, vector<32x160xf32>
    %cst_10 = arith.constant dense<0.000000e+00> : vector<8x160xf32>
    %13 = tpu.matmul %11, %12, %cst_10 {dimension_numbers = #tpu.dot_dimension_numbers<[1], [0], [0], [1], [0, 0, 1, 1], [], []>} : vector<8x32xf32>, vector<32x160xf32>, vector<8x160xf32> -> vector<8x160xf32>
    %c0_11 = arith.constant 0 : index
    %c0_12 = arith.constant 0 : index
    %14 = vector.load %arg5[%c0_11, %c0_12] : memref<1x160xf32, #tpu.memory_space<vmem>>, vector<1x160xf32>
    %15 = vector.broadcast %14 : vector<1x160xf32> to vector<8x160xf32>
    %16 = arith.addf %13, %15 : vector<8x160xf32>
    %17 = vector.extract_strided_slice %16 {offsets = [0, 0], sizes = [8, 128], strides = [1, 1]} : vector<8x160xf32> to vector<8x128xf32>
    %c0_13 = arith.constant 0 : index
    %c0_14 = arith.constant 0 : index
    %18 = vector.load %arg8[%c0_13, %c0_14] : memref<8x128xf32, #tpu.memory_space<vmem>>, vector<8x128xf32>
    tpu.vector_store %arg8[%c0_13, %c0_14], %17 {strides = array<i32>} : memref<8x128xf32, #tpu.memory_space<vmem>>, vector<8x128xf32>,
    %19 = vector.extract_strided_slice %16 {offsets = [0, 128], sizes = [8, 32], strides = [1, 1]} : vector<8x160xf32> to vector<8x32xf32>
    %cst_15 = arith.constant 0.000000e+00 : f32
    %20 = vector.broadcast %cst_15 : f32 to vector<8x32xf32>
    %21 = arith.maximumf %19, %20 : vector<8x32xf32>
    %c0_16 = arith.constant 0 : index
    %c0_17 = arith.constant 0 : index
    %22 = vector.load %arg6[%c0_16, %c0_17] : memref<32x128xf32, #tpu.memory_space<vmem>>, vector<32x128xf32>
    %cst_18 = arith.constant dense<0.000000e+00> : vector<8x128xf32>
    %23 = tpu.matmul %21, %22, %cst_18 {dimension_numbers = #tpu.dot_dimension_numbers<[1], [0], [0], [1], [0, 0, 1, 1], [], []>} : vector<8x32xf32>, vector<32x128xf32>, vector<8x128xf32> -> vector<8x128xf32>
    %c0_19 = arith.constant 0 : index
    %c0_20 = arith.constant 0 : index
    %24 = vector.load %arg7[%c0_19, %c0_20] : memref<1x128xf32, #tpu.memory_space<vmem>>, vector<1x128xf32>
    %25 = vector.broadcast %24 : vector<1x128xf32> to vector<8x128xf32>
    %26 = arith.addf %23, %25 : vector<8x128xf32>
    %27 = arith.mulf %26, %26 : vector<8x128xf32>
    %cst_21 = arith.constant dense<0.000000e+00> : vector<8xf32>
    %28 = vector.multi_reduction <add>, %27, %cst_21 [1] : vector<8x128xf32> to vector<8xf32>
    %29 = vector.shape_cast %28 : vector<8xf32> to vector<8x1xf32>
    %cst_22 = arith.constant 1.000000e-24 : f32
    %30 = vector.broadcast %cst_22 : f32 to vector<8x1xf32>
    %31 = arith.maximumf %29, %30 : vector<8x1xf32>
    %32 = math.rsqrt %31 : vector<8x1xf32>
    %33 = vector.broadcast %32 : vector<8x1xf32> to vector<8x128xf32>
    %34 = arith.mulf %26, %33 : vector<8x128xf32>
    %c0_23 = arith.constant 0 : index
    %c0_24 = arith.constant 0 : index
    %35 = vector.load %arg9[%c0_23, %c0_24] : memref<8x128xf32, #tpu.memory_space<vmem>>, vector<8x128xf32>
    tpu.vector_store %arg9[%c0_23, %c0_24], %34 {strides = array<i32>} : memref<8x128xf32, #tpu.memory_space<vmem>>, vector<8x128xf32>,
    return
  }
  func.func @transform_0(%arg0: i32) -> (i32, i32) {
    %c0_i32 = arith.constant 0 : i32
    %c0_i32_0 = arith.constant 0 : i32
    return %arg0, %c0_i32 : i32, i32
  }
  func.func @transform_1(%arg0: i32) -> (i32, i32) {
    %c0_i32 = arith.constant 0 : i32
    %c0_i32_0 = arith.constant 0 : i32
    %c0_i32_1 = arith.constant 0 : i32
    return %c0_i32, %c0_i32_0 : i32, i32
  }
  func.func @transform_2(%arg0: i32) -> (i32, i32) {
    %c0_i32 = arith.constant 0 : i32
    %c0_i32_0 = arith.constant 0 : i32
    %c0_i32_1 = arith.constant 0 : i32
    return %c0_i32, %c0_i32_0 : i32, i32
  }
  func.func @transform_3(%arg0: i32) -> (i32, i32) {
    %c0_i32 = arith.constant 0 : i32
    %c0_i32_0 = arith.constant 0 : i32
    %c0_i32_1 = arith.constant 0 : i32
    return %c0_i32, %c0_i32_0 : i32, i32
  }
  func.func @transform_4(%arg0: i32) -> (i32, i32) {
    %c0_i32 = arith.constant 0 : i32
    %c0_i32_0 = arith.constant 0 : i32
    %c0_i32_1 = arith.constant 0 : i32
    return %c0_i32, %c0_i32_0 : i32, i32
  }
  func.func @transform_5(%arg0: i32) -> (i32, i32) {
    %c0_i32 = arith.constant 0 : i32
    %c0_i32_0 = arith.constant 0 : i32
    %c0_i32_1 = arith.constant 0 : i32
    return %c0_i32, %c0_i32_0 : i32, i32
  }
  func.func @transform_6(%arg0: i32) -> (i32, i32) {
    %c0_i32 = arith.constant 0 : i32
    %c0_i32_0 = arith.constant 0 : i32
    %c0_i32_1 = arith.constant 0 : i32
    return %c0_i32, %c0_i32_0 : i32, i32
  }
  func.func @transform_7(%arg0: i32) -> (i32, i32) {
    %c0_i32 = arith.constant 0 : i32
    %c0_i32_0 = arith.constant 0 : i32
    return %arg0, %c0_i32 : i32, i32
  }
  func.func @transform_8(%arg0: i32) -> (i32, i32) {
    %c0_i32 = arith.constant 0 : i32
    %c0_i32_0 = arith.constant 0 : i32
    return %arg0, %c0_i32 : i32, i32
  }
}

</mosaic_0001>

<llo_original>
// kernel: tpu_custom_call.1
$region0: #{tpu_custom_call.1}
  #allocation0 [shape = 'u32[]', space=smem, size = 0x4, offset = 0x4, fixed_abs, tag = 'smem constant byte address 0x4 - core index']
  #allocation1 [shape = 'u32[144,128]{1,0:T(1,128)}', space=vmem, size = 0x12000, scoped, tag = 'internal scratch']
  %s0 = inlined_call_operand.vmem [shape: bf16[2048,32], index: 0, kind: input, shape index: {}]
  %s1 = inlined_call_operand.vmem [shape: bf16[32,32], index: 1, kind: input, shape index: {}]
  %s2 = inlined_call_operand.vmem [shape: f32[1,32], index: 2, kind: input, shape index: {}]
  %s3 = inlined_call_operand.vmem [shape: f32[32,160], index: 3, kind: input, shape index: {}]
  %s4 = inlined_call_operand.vmem [shape: f32[1,160], index: 4, kind: input, shape index: {}]
  %s5 = inlined_call_operand.vmem [shape: f32[32,128], index: 5, kind: input, shape index: {}]
  %s6 = inlined_call_operand.vmem [shape: f32[1,128], index: 6, kind: input, shape index: {}]
  %s7 = inlined_call_operand.hbm [shape: f32[8,128], index: 7, kind: output, shape index: {0}]
  %s8 = inlined_call_operand.hbm [shape: f32[8,128], index: 8, kind: output, shape index: {1}]
  %9 = xla_tuple %s7, %s8
  %s10 = sld [smem:[#allocation0]]
  $region46: #{tpu_custom_call.1} parent=0
    _
  %s12 = ssub.s32 1, %s10
  %s13 = scalar_select 0, %s12, %s10
  $region1: #{tpu_custom_call.1} parent=0
    #allocation2 [shape = 'u8[4096]{0}', space=vmem, size = 0x1000, scoped, tag = 'output window, operand 0, single buffered']
    #allocation3 [shape = 's32[1]{0}', space=sflag, size = 0x4, scoped, tag = 'scoped memory for tpu_custom_call.1']
    #allocation4 [shape = 'u8[4096]{0}', space=vmem, size = 0x1000, scoped, tag = 'output window, operand 1, single buffered']
    #allocation5 [shape = 's32[1]{0}', space=sflag, size = 0x4, scoped, tag = 'scoped memory for tpu_custom_call.1']
    %14 = vsyncpa [#allocation3], 0
    %15 = vsyncpa [#allocation5], 0
    // Predicated region
    $region2: #{tpu_custom_call.1} parent=1 // pred_check
      _
    $region3: #{tpu_custom_call.1} parent=1 // pred_check_branch
      %17 = sbr.rel (0) target = $region5
    $region4: #{tpu_custom_call.1} parent=1 // pred_region
      _
    $region5: #{tpu_custom_call.1} parent=1 // pred_fallthru
      _
    // Predicated region
    $region6: #{tpu_custom_call.1} parent=1 // pred_check
      _
    $region7: #{tpu_custom_call.1} parent=1 // pred_check_branch
      %19 = sbr.rel (0) target = $region9
    $region8: #{tpu_custom_call.1} parent=1 // pred_region
      _
    $region9: #{tpu_custom_call.1} parent=1 // pred_fallthru
      _
    // Predicated region
    $region10: #{tpu_custom_call.1} parent=1 // pred_check
      _
    $region11: #{tpu_custom_call.1} parent=1 // pred_check_branch
      %21 = sbr.rel (0) target = $region13
    $region12: #{tpu_custom_call.1} parent=1 // pred_region
      _
    $region13: #{tpu_custom_call.1} parent=1 // pred_fallthru
      _
    // Predicated region
    $region14: #{tpu_custom_call.1} parent=1 // pred_check
      _
    $region15: #{tpu_custom_call.1} parent=1 // pred_check_branch
      %23 = sbr.rel (0) target = $region17
    $region16: #{tpu_custom_call.1} parent=1 // pred_region
      _
    $region17: #{tpu_custom_call.1} parent=1 // pred_fallthru
      _
    // Predicated region
    $region18: #{tpu_custom_call.1} parent=1 // pred_check
      _
    $region19: #{tpu_custom_call.1} parent=1 // pred_check_branch
      %25 = sbr.rel (0) target = $region21
    $region20: #{tpu_custom_call.1} parent=1 // pred_region
      _
    $region21: #{tpu_custom_call.1} parent=1 // pred_fallthru
      _
    // Predicated region
    $region22: #{tpu_custom_call.1} parent=1 // pred_check
      _
    $region23: #{tpu_custom_call.1} parent=1 // pred_check_branch
      %27 = sbr.rel (0) target = $region25
    $region24: #{tpu_custom_call.1} parent=1 // pred_region
      _
    $region25: #{tpu_custom_call.1} parent=1 // pred_fallthru
      _
    // Predicated region
    $region26: #{tpu_custom_call.1} parent=1 // pred_check
      _
    $region27: #{tpu_custom_call.1} parent=1 // pred_check_branch
      %29 = sbr.rel (0) target = $region29
    $region28: #{tpu_custom_call.1} parent=1 // pred_region
      _
    $region29: #{tpu_custom_call.1} parent=1 // pred_fallthru
      _
    %v31 = vld [vmem:[%s0] sm:$0xf]
    %v32 = vld [vmem:[%s0 + $0x4] sm:$0xf]
    %v33 = vld [vmem:[%s0 + $0x8] sm:$0xf]
    %v34 = vld [vmem:[%s0 + $0xc] sm:$0xf]
    %v35 = vld [vmem:[%s0 + $0x10] sm:$0xf]
    %v36 = vld [vmem:[%s0 + $0x14] sm:$0xf]
    %v37 = vld [vmem:[%s0 + $0x18] sm:$0xf]
    %v38 = vld [vmem:[%s0 + $0x1c] sm:$0xf]
    %v39 = vld [vmem:[%s0 + $0x20] sm:$0xf]
    %v40 = vld [vmem:[%s0 + $0x24] sm:$0xf]
    %v41 = vld [vmem:[%s0 + $0x28] sm:$0xf]
    %v42 = vld [vmem:[%s0 + $0x2c] sm:$0xf]
    %v43 = vld [vmem:[%s0 + $0x30] sm:$0xf]
    %v44 = vld [vmem:[%s0 + $0x34] sm:$0xf]
    %v45 = vld [vmem:[%s0 + $0x38] sm:$0xf]
    %v46 = vld [vmem:[%s0 + $0x3c] sm:$0xf]
    %v47 = vld [vmem:[%s0 + $0x40] sm:$0xf]
    %v48 = vld [vmem:[%s0 + $0x44] sm:$0xf]
    %v49 = vld [vmem:[%s0 + $0x48] sm:$0xf]
    %v50 = vld [vmem:[%s0 + $0x4c] sm:$0xf]
    %v51 = vld [vmem:[%s0 + $0x50] sm:$0xf]
    %v52 = vld [vmem:[%s0 + $0x54] sm:$0xf]
    %v53 = vld [vmem:[%s0 + $0x58] sm:$0xf]
    %v54 = vld [vmem:[%s0 + $0x5c] sm:$0xf]
    %v55 = vld [vmem:[%s0 + $0x60] sm:$0xf]
    %v56 = vld [vmem:[%s0 + $0x64] sm:$0xf]
    %v57 = vld [vmem:[%s0 + $0x68] sm:$0xf]
    %v58 = vld [vmem:[%s0 + $0x6c] sm:$0xf]
    %v59 = vld [vmem:[%s0 + $0x70] sm:$0xf]
    %v60 = vld [vmem:[%s0 + $0x74] sm:$0xf]
    %v61 = vld [vmem:[%s0 + $0x78] sm:$0xf]
    %v62 = vld [vmem:[%s0 + $0x7c] sm:$0xf]
    %v63 = vld [vmem:[%s0 + $0x80] sm:$0xf]
    %v64 = vld [vmem:[%s0 + $0x84] sm:$0xf]
    %v65 = vld [vmem:[%s0 + $0x88] sm:$0xf]
    %v66 = vld [vmem:[%s0 + $0x8c] sm:$0xf]
    %v67 = vld [vmem:[%s0 + $0x90] sm:$0xf]
    %v68 = vld [vmem:[%s0 + $0x94] sm:$0xf]
    %v69 = vld [vmem:[%s0 + $0x98] sm:$0xf]
    %v70 = vld [vmem:[%s0 + $0x9c] sm:$0xf]
    %v71 = vld [vmem:[%s0 + $0xa0] sm:$0xf]
    %v72 = vld [vmem:[%s0 + $0xa4] sm:$0xf]
    %v73 = vld [vmem:[%s0 + $0xa8] sm:$0xf]
    %v74 = vld [vmem:[%s0 + $0xac] sm:$0xf]
    %v75 = vld [vmem:[%s0 + $0xb0] sm:$0xf]
    %v76 = vld [vmem:[%s0 + $0xb4] sm:$0xf]
    %v77 = vld [vmem:[%s0 + $0xb8] sm:$0xf]
    %v78 = vld [vmem:[%s0 + $0xbc] sm:$0xf]
    %v79 = vld [vmem:[%s0 + $0xc0] sm:$0xf]
    %v80 = vld [vmem:[%s0 + $0xc4] sm:$0xf]
    %v81 = vld [vmem:[%s0 + $0xc8] sm:$0xf]
    %v82 = vld [vmem:[%s0 + $0xcc] sm:$0xf]
    %v83 = vld [vmem:[%s0 + $0xd0] sm:$0xf]
    %v84 = vld [vmem:[%s0 + $0xd4] sm:$0xf]
    %v85 = vld [vmem:[%s0 + $0xd8] sm:$0xf]
    %v86 = vld [vmem:[%s0 + $0xdc] sm:$0xf]
    %v87 = vld [vmem:[%s0 + $0xe0] sm:$0xf]
    %v88 = vld [vmem:[%s0 + $0xe4] sm:$0xf]
    %v89 = vld [vmem:[%s0 + $0xe8] sm:$0xf]
    %v90 = vld [vmem:[%s0 + $0xec] sm:$0xf]
    %v91 = vld [vmem:[%s0 + $0xf0] sm:$0xf]
    %v92 = vld [vmem:[%s0 + $0xf4] sm:$0xf]
    %v93 = vld [vmem:[%s0 + $0xf8] sm:$0xf]
    %v94 = vld [vmem:[%s0 + $0xfc] sm:$0xf]
    %v95 = vld [vmem:[%s0 + $0x100] sm:$0xf]
    %v96 = vld [vmem:[%s0 + $0x104] sm:$0xf]
    %v97 = vld [vmem:[%s0 + $0x108] sm:$0xf]
    %v98 = vld [vmem:[%s0 + $0x10c] sm:$0xf]
    %v99 = vld [vmem:[%s0 + $0x110] sm:$0xf]
    %v100 = vld [vmem:[%s0 + $0x114] sm:$0xf]
    %v101 = vld [vmem:[%s0 + $0x118] sm:$0xf]
    %v102 = vld [vmem:[%s0 + $0x11c] sm:$0xf]
    %v103 = vld [vmem:[%s0 + $0x120] sm:$0xf]
    %v104 = vld [vmem:[%s0 + $0x124] sm:$0xf]
    %v105 = vld [vmem:[%s0 + $0x128] sm:$0xf]
    %v106 = vld [vmem:[%s0 + $0x12c] sm:$0xf]
    %v107 = vld [vmem:[%s0 + $0x130] sm:$0xf]
    %v108 = vld [vmem:[%s0 + $0x134] sm:$0xf]
    %v109 = vld [vmem:[%s0 + $0x138] sm:$0xf]
    %v110 = vld [vmem:[%s0 + $0x13c] sm:$0xf]
    %v111 = vld [vmem:[%s0 + $0x140] sm:$0xf]
    %v112 = vld [vmem:[%s0 + $0x144] sm:$0xf]
    %v113 = vld [vmem:[%s0 + $0x148] sm:$0xf]
    %v114 = vld [vmem:[%s0 + $0x14c] sm:$0xf]
    %v115 = vld [vmem:[%s0 + $0x150] sm:$0xf]
    %v116 = vld [vmem:[%s0 + $0x154] sm:$0xf]
    %v117 = vld [vmem:[%s0 + $0x158] sm:$0xf]
    %v118 = vld [vmem:[%s0 + $0x15c] sm:$0xf]
    %v119 = vld [vmem:[%s0 + $0x160] sm:$0xf]
    %v120 = vld [vmem:[%s0 + $0x164] sm:$0xf]
    %v121 = vld [vmem:[%s0 + $0x168] sm:$0xf]
    %v122 = vld [vmem:[%s0 + $0x16c] sm:$0xf]
    %v123 = vld [vmem:[%s0 + $0x170] sm:$0xf]
    %v124 = vld [vmem:[%s0 + $0x174] sm:$0xf]
    %v125 = vld [vmem:[%s0 + $0x178] sm:$0xf]
    %v126 = vld [vmem:[%s0 + $0x17c] sm:$0xf]
    %v127 = vld [vmem:[%s0 + $0x180] sm:$0xf]
    %v128 = vld [vmem:[%s0 + $0x184] sm:$0xf]
    %v129 = vld [vmem:[%s0 + $0x188] sm:$0xf]
    %v130 = vld [vmem:[%s0 + $0x18c] sm:$0xf]
    %v131 = vld [vmem:[%s0 + $0x190] sm:$0xf]
    %v132 = vld [vmem:[%s0 + $0x194] sm:$0xf]
    %v133 = vld [vmem:[%s0 + $0x198] sm:$0xf]
    %v134 = vld [vmem:[%s0 + $0x19c] sm:$0xf]
    %v135 = vld [vmem:[%s0 + $0x1a0] sm:$0xf]
    %v136 = vld [vmem:[%s0 + $0x1a4] sm:$0xf]
    %v137 = vld [vmem:[%s0 + $0x1a8] sm:$0xf]
    %v138 = vld [vmem:[%s0 + $0x1ac] sm:$0xf]
    %v139 = vld [vmem:[%s0 + $0x1b0] sm:$0xf]
    %v140 = vld [vmem:[%s0 + $0x1b4] sm:$0xf]
    %v141 = vld [vmem:[%s0 + $0x1b8] sm:$0xf]
    %v142 = vld [vmem:[%s0 + $0x1bc] sm:$0xf]
    %v143 = vld [vmem:[%s0 + $0x1c0] sm:$0xf]
    %v144 = vld [vmem:[%s0 + $0x1c4] sm:$0xf]
    %v145 = vld [vmem:[%s0 + $0x1c8] sm:$0xf]
    %v146 = vld [vmem:[%s0 + $0x1cc] sm:$0xf]
    %v147 = vld [vmem:[%s0 + $0x1d0] sm:$0xf]
    %v148 = vld [vmem:[%s0 + $0x1d4] sm:$0xf]
    %v149 = vld [vmem:[%s0 + $0x1d8] sm:$0xf]
    %v150 = vld [vmem:[%s0 + $0x1dc] sm:$0xf]
    %v151 = vld [vmem:[%s0 + $0x1e0] sm:$0xf]
    %v152 = vld [vmem:[%s0 + $0x1e4] sm:$0xf]
    %v153 = vld [vmem:[%s0 + $0x1e8] sm:$0xf]
    %v154 = vld [vmem:[%s0 + $0x1ec] sm:$0xf]
    %v155 = vld [vmem:[%s0 + $0x1f0] sm:$0xf]
    %v156 = vld [vmem:[%s0 + $0x1f4] sm:$0xf]
    %v157 = vld [vmem:[%s0 + $0x1f8] sm:$0xf]
    %v158 = vld [vmem:[%s0 + $0x1fc] sm:$0xf]
    %v159 = vld [vmem:[%s0 + $0x200] sm:$0xf]
    %v160 = vld [vmem:[%s0 + $0x204] sm:$0xf]
    %v161 = vld [vmem:[%s0 + $0x208] sm:$0xf]
    %v162 = vld [vmem:[%s0 + $0x20c] sm:$0xf]
    %v163 = vld [vmem:[%s0 + $0x210] sm:$0xf]
    %v164 = vld [vmem:[%s0 + $0x214] sm:$0xf]
    %v165 = vld [vmem:[%s0 + $0x218] sm:$0xf]
    %v166 = vld [vmem:[%s0 + $0x21c] sm:$0xf]
    %v167 = vld [vmem:[%s0 + $0x220] sm:$0xf]
    %v168 = vld [vmem:[%s0 + $0x224] sm:$0xf]
    %v169 = vld [vmem:[%s0 + $0x228] sm:$0xf]
    %v170 = vld [vmem:[%s0 + $0x22c] sm:$0xf]
    %v171 = vld [vmem:[%s0 + $0x230] sm:$0xf]
    %v172 = vld [vmem:[%s0 + $0x234] sm:$0xf]
    %v173 = vld [vmem:[%s0 + $0x238] sm:$0xf]
    %v174 = vld [vmem:[%s0 + $0x23c] sm:$0xf]
    %v175 = vld [vmem:[%s0 + $0x240] sm:$0xf]
    %v176 = vld [vmem:[%s0 + $0x244] sm:$0xf]
    %v177 = vld [vmem:[%s0 + $0x248] sm:$0xf]
    %v178 = vld [vmem:[%s0 + $0x24c] sm:$0xf]
    %v179 = vld [vmem:[%s0 + $0x250] sm:$0xf]
    %v180 = vld [vmem:[%s0 + $0x254] sm:$0xf]
    %v181 = vld [vmem:[%s0 + $0x258] sm:$0xf]
    %v182 = vld [vmem:[%s0 + $0x25c] sm:$0xf]
    %v183 = vld [vmem:[%s0 + $0x260] sm:$0xf]
    %v184 = vld [vmem:[%s0 + $0x264] sm:$0xf]
    %v185 = vld [vmem:[%s0 + $0x268] sm:$0xf]
    %v186 = vld [vmem:[%s0 + $0x26c] sm:$0xf]
    %v187 = vld [vmem:[%s0 + $0x270] sm:$0xf]
    %v188 = vld [vmem:[%s0 + $0x274] sm:$0xf]
    %v189 = vld [vmem:[%s0 + $0x278] sm:$0xf]
    %v190 = vld [vmem:[%s0 + $0x27c] sm:$0xf]
    %v191 = vld [vmem:[%s0 + $0x280] sm:$0xf]
    %v192 = vld [vmem:[%s0 + $0x284] sm:$0xf]
    %v193 = vld [vmem:[%s0 + $0x288] sm:$0xf]
    %v194 = vld [vmem:[%s0 + $0x28c] sm:$0xf]
    %v195 = vld [vmem:[%s0 + $0x290] sm:$0xf]
    %v196 = vld [vmem:[%s0 + $0x294] sm:$0xf]
    %v197 = vld [vmem:[%s0 + $0x298] sm:$0xf]
    %v198 = vld [vmem:[%s0 + $0x29c] sm:$0xf]
    %v199 = vld [vmem:[%s0 + $0x2a0] sm:$0xf]
    %v200 = vld [vmem:[%s0 + $0x2a4] sm:$0xf]
    %v201 = vld [vmem:[%s0 + $0x2a8] sm:$0xf]
    %v202 = vld [vmem:[%s0 + $0x2ac] sm:$0xf]
    %v203 = vld [vmem:[%s0 + $0x2b0] sm:$0xf]
    %v204 = vld [vmem:[%s0 + $0x2b4] sm:$0xf]
    %v205 = vld [vmem:[%s0 + $0x2b8] sm:$0xf]
    %v206 = vld [vmem:[%s0 + $0x2bc] sm:$0xf]
    %v207 = vld [vmem:[%s0 + $0x2c0] sm:$0xf]
    %v208 = vld [vmem:[%s0 + $0x2c4] sm:$0xf]
    %v209 = vld [vmem:[%s0 + $0x2c8] sm:$0xf]
    %v210 = vld [vmem:[%s0 + $0x2cc] sm:$0xf]
    %v211 = vld [vmem:[%s0 + $0x2d0] sm:$0xf]
    %v212 = vld [vmem:[%s0 + $0x2d4] sm:$0xf]
    %v213 = vld [vmem:[%s0 + $0x2d8] sm:$0xf]
    %v214 = vld [vmem:[%s0 + $0x2dc] sm:$0xf]
    %v215 = vld [vmem:[%s0 + $0x2e0] sm:$0xf]
    %v216 = vld [vmem:[%s0 + $0x2e4] sm:$0xf]
    %v217 = vld [vmem:[%s0 + $0x2e8] sm:$0xf]
    %v218 = vld [vmem:[%s0 + $0x2ec] sm:$0xf]
    %v219 = vld [vmem:[%s0 + $0x2f0] sm:$0xf]
    %v220 = vld [vmem:[%s0 + $0x2f4] sm:$0xf]
    %v221 = vld [vmem:[%s0 + $0x2f8] sm:$0xf]
    %v222 = vld [vmem:[%s0 + $0x2fc] sm:$0xf]
    %v223 = vld [vmem:[%s0 + $0x300] sm:$0xf]
    %v224 = vld [vmem:[%s0 + $0x304] sm:$0xf]
    %v225 = vld [vmem:[%s0 + $0x308] sm:$0xf]
    %v226 = vld [vmem:[%s0 + $0x30c] sm:$0xf]
    %v227 = vld [vmem:[%s0 + $0x310] sm:$0xf]
    %v228 = vld [vmem:[%s0 + $0x314] sm:$0xf]
    %v229 = vld [vmem:[%s0 + $0x318] sm:$0xf]
    %v230 = vld [vmem:[%s0 + $0x31c] sm:$0xf]
    %v231 = vld [vmem:[%s0 + $0x320] sm:$0xf]
    %v232 = vld [vmem:[%s0 + $0x324] sm:$0xf]
    %v233 = vld [vmem:[%s0 + $0x328] sm:$0xf]
    %v234 = vld [vmem:[%s0 + $0x32c] sm:$0xf]
    %v235 = vld [vmem:[%s0 + $0x330] sm:$0xf]
    %v236 = vld [vmem:[%s0 + $0x334] sm:$0xf]
    %v237 = vld [vmem:[%s0 + $0x338] sm:$0xf]
    %v238 = vld [vmem:[%s0 + $0x33c] sm:$0xf]
    %v239 = vld [vmem:[%s0 + $0x340] sm:$0xf]
    %v240 = vld [vmem:[%s0 + $0x344] sm:$0xf]
    %v241 = vld [vmem:[%s0 + $0x348] sm:$0xf]
    %v242 = vld [vmem:[%s0 + $0x34c] sm:$0xf]
    %v243 = vld [vmem:[%s0 + $0x350] sm:$0xf]
    %v244 = vld [vmem:[%s0 + $0x354] sm:$0xf]
    %v245 = vld [vmem:[%s0 + $0x358] sm:$0xf]
    %v246 = vld [vmem:[%s0 + $0x35c] sm:$0xf]
    %v247 = vld [vmem:[%s0 + $0x360] sm:$0xf]
    %v248 = vld [vmem:[%s0 + $0x364] sm:$0xf]
    %v249 = vld [vmem:[%s0 + $0x368] sm:$0xf]
    %v250 = vld [vmem:[%s0 + $0x36c] sm:$0xf]
    %v251 = vld [vmem:[%s0 + $0x370] sm:$0xf]
    %v252 = vld [vmem:[%s0 + $0x374] sm:$0xf]
    %v253 = vld [vmem:[%s0 + $0x378] sm:$0xf]
    %v254 = vld [vmem:[%s0 + $0x37c] sm:$0xf]
    %v255 = vld [vmem:[%s0 + $0x380] sm:$0xf]
    %v256 = vld [vmem:[%s0 + $0x384] sm:$0xf]
    %v257 = vld [vmem:[%s0 + $0x388] sm:$0xf]
    %v258 = vld [vmem:[%s0 + $0x38c] sm:$0xf]
    %v259 = vld [vmem:[%s0 + $0x390] sm:$0xf]
    %v260 = vld [vmem:[%s0 + $0x394] sm:$0xf]
    %v261 = vld [vmem:[%s0 + $0x398] sm:$0xf]
    %v262 = vld [vmem:[%s0 + $0x39c] sm:$0xf]
    %v263 = vld [vmem:[%s0 + $0x3a0] sm:$0xf]
    %v264 = vld [vmem:[%s0 + $0x3a4] sm:$0xf]
    %v265 = vld [vmem:[%s0 + $0x3a8] sm:$0xf]
    %v266 = vld [vmem:[%s0 + $0x3ac] sm:$0xf]
    %v267 = vld [vmem:[%s0 + $0x3b0] sm:$0xf]
    %v268 = vld [vmem:[%s0 + $0x3b4] sm:$0xf]
    %v269 = vld [vmem:[%s0 + $0x3b8] sm:$0xf]
    %v270 = vld [vmem:[%s0 + $0x3bc] sm:$0xf]
    %v271 = vld [vmem:[%s0 + $0x3c0] sm:$0xf]
    %v272 = vld [vmem:[%s0 + $0x3c4] sm:$0xf]
    %v273 = vld [vmem:[%s0 + $0x3c8] sm:$0xf]
    %v274 = vld [vmem:[%s0 + $0x3cc] sm:$0xf]
    %v275 = vld [vmem:[%s0 + $0x3d0] sm:$0xf]
    %v276 = vld [vmem:[%s0 + $0x3d4] sm:$0xf]
    %v277 = vld [vmem:[%s0 + $0x3d8] sm:$0xf]
    %v278 = vld [vmem:[%s0 + $0x3dc] sm:$0xf]
    %v279 = vld [vmem:[%s0 + $0x3e0] sm:$0xf]
    %v280 = vld [vmem:[%s0 + $0x3e4] sm:$0xf]
    %v281 = vld [vmem:[%s0 + $0x3e8] sm:$0xf]
    %v282 = vld [vmem:[%s0 + $0x3ec] sm:$0xf]
    %v283 = vld [vmem:[%s0 + $0x3f0] sm:$0xf]
    %v284 = vld [vmem:[%s0 + $0x3f4] sm:$0xf]
    %v285 = vld [vmem:[%s0 + $0x3f8] sm:$0xf]
    %v286 = vld [vmem:[%s0 + $0x3fc] sm:$0xf]
    %v287 = vld [vmem:[%s1] sm:$0xf]
    %v288 = vld [vmem:[%s1 + $0x4] sm:$0xf]
    %v289 = vld [vmem:[%s1 + $0x8] sm:$0xf]
    %v290 = vld [vmem:[%s1 + $0xc] sm:$0xf]
    %v291 = vld [vmem:[%s2] sm:$0x1]
    %v293 = vlaneseq
    %v294 = vshrl.u32 %v293, 7
    %v295 = vsub.s32 0, %v294
    %v296 = vrot.slane %v291, %v295
    %v554 = vunpack.c.l.b16 %v31
    %v555 = vunpack.c.l.b16 %v32
    %v556 = vunpack.c.l.b16 %v33
    %v557 = vunpack.c.l.b16 %v34
    %v558 = vunpack.c.l.b16 %v35
    %v559 = vunpack.c.l.b16 %v36
    %v560 = vunpack.c.l.b16 %v37
    %v561 = vunpack.c.l.b16 %v38
    %v562 = vunpack.c.l.b16 %v39
    %v563 = vunpack.c.l.b16 %v40
    %v564 = vunpack.c.l.b16 %v41
    %v565 = vunpack.c.l.b16 %v42
    %v566 = vunpack.c.l.b16 %v43
    %v567 = vunpack.c.l.b16 %v44
    %v568 = vunpack.c.l.b16 %v45
    %v569 = vunpack.c.l.b16 %v46
    %v570 = vunpack.c.l.b16 %v47
    %v571 = vunpack.c.l.b16 %v48
    %v572 = vunpack.c.l.b16 %v49
    %v573 = vunpack.c.l.b16 %v50
    %v574 = vunpack.c.l.b16 %v51
    %v575 = vunpack.c.l.b16 %v52
    %v576 = vunpack.c.l.b16 %v53
    %v577 = vunpack.c.l.b16 %v54
    %v578 = vunpack.c.l.b16 %v55
    %v579 = vunpack.c.l.b16 %v56
    %v580 = vunpack.c.l.b16 %v57
    %v581 = vunpack.c.l.b16 %v58
    %v582 = vunpack.c.l.b16 %v59
    %v583 = vunpack.c.l.b16 %v60
    %v584 = vunpack.c.l.b16 %v61
    %v585 = vunpack.c.l.b16 %v62
    %v586 = vunpack.c.l.b16 %v63
    %v587 = vunpack.c.l.b16 %v64
    %v588 = vunpack.c.l.b16 %v65
    %v589 = vunpack.c.l.b16 %v66
    %v590 = vunpack.c.l.b16 %v67
    %v591 = vunpack.c.l.b16 %v68
    %v592 = vunpack.c.l.b16 %v69
    %v593 = vunpack.c.l.b16 %v70
    %v594 = vunpack.c.l.b16 %v71
    %v595 = vunpack.c.l.b16 %v72
    %v596 = vunpack.c.l.b16 %v73
    %v597 = vunpack.c.l.b16 %v74
    %v598 = vunpack.c.l.b16 %v75
    %v599 = vunpack.c.l.b16 %v76
    %v600 = vunpack.c.l.b16 %v77
    %v601 = vunpack.c.l.b16 %v78
    %v602 = vunpack.c.l.b16 %v79
    %v603 = vunpack.c.l.b16 %v80
    %v604 = vunpack.c.l.b16 %v81
    %v605 = vunpack.c.l.b16 %v82
    %v606 = vunpack.c.l.b16 %v83
    %v607 = vunpack.c.l.b16 %v84
    %v608 = vunpack.c.l.b16 %v85
    %v609 = vunpack.c.l.b16 %v86
    %v610 = vunpack.c.l.b16 %v87
    %v611 = vunpack.c.l.b16 %v88
    %v612 = vunpack.c.l.b16 %v89
    %v613 = vunpack.c.l.b16 %v90
    %v614 = vunpack.c.l.b16 %v91
    %v615 = vunpack.c.l.b16 %v92
    %v616 = vunpack.c.l.b16 %v93
    %v617 = vunpack.c.l.b16 %v94
    %v618 = vunpack.c.l.b16 %v95
    %v619 = vunpack.c.l.b16 %v96
    %v620 = vunpack.c.l.b16 %v97
    %v621 = vunpack.c.l.b16 %v98
    %v622 = vunpack.c.l.b16 %v99
    %v623 = vunpack.c.l.b16 %v100
    %v624 = vunpack.c.l.b16 %v101
    %v625 = vunpack.c.l.b16 %v102
    %v626 = vunpack.c.l.b16 %v103
    %v627 = vunpack.c.l.b16 %v104
    %v628 = vunpack.c.l.b16 %v105
    %v629 = vunpack.c.l.b16 %v106
    %v630 = vunpack.c.l.b16 %v107
    %v631 = vunpack.c.l.b16 %v108
    %v632 = vunpack.c.l.b16 %v109
    %v633 = vunpack.c.l.b16 %v110
    %v634 = vunpack.c.l.b16 %v111
    %v635 = vunpack.c.l.b16 %v112
    %v636 = vunpack.c.l.b16 %v113
    %v637 = vunpack.c.l.b16 %v114
    %v638 = vunpack.c.l.b16 %v115
    %v639 = vunpack.c.l.b16 %v116
    %v640 = vunpack.c.l.b16 %v117
    %v641 = vunpack.c.l.b16 %v118
    %v642 = vunpack.c.l.b16 %v119
    %v643 = vunpack.c.l.b16 %v120
    %v644 = vunpack.c.l.b16 %v121
    %v645 = vunpack.c.l.b16 %v122
    %v646 = vunpack.c.l.b16 %v123
    %v647 = vunpack.c.l.b16 %v124
    %v648 = vunpack.c.l.b16 %v125
    %v649 = vunpack.c.l.b16 %v126
    %v650 = vunpack.c.l.b16 %v127
    %v651 = vunpack.c.l.b16 %v128
    %v652 = vunpack.c.l.b16 %v129
    %v653 = vunpack.c.l.b16 %v130
    %v654 = vunpack.c.l.b16 %v131
    %v655 = vunpack.c.l.b16 %v132
    %v656 = vunpack.c.l.b16 %v133
    %v657 = vunpack.c.l.b16 %v134
    %v658 = vunpack.c.l.b16 %v135
    %v659 = vunpack.c.l.b16 %v136
    %v660 = vunpack.c.l.b16 %v137
    %v661 = vunpack.c.l.b16 %v138
    %v662 = vunpack.c.l.b16 %v139
    %v663 = vunpack.c.l.b16 %v140
    %v664 = vunpack.c.l.b16 %v141
    %v665 = vunpack.c.l.b16 %v142
    %v666 = vunpack.c.l.b16 %v143
    %v667 = vunpack.c.l.b16 %v144
    %v668 = vunpack.c.l.b16 %v145
    %v669 = vunpack.c.l.b16 %v146
    %v670 = vunpack.c.l.b16 %v147
    %v671 = vunpack.c.l.b16 %v148
    %v672 = vunpack.c.l.b16 %v149
    %v673 = vunpack.c.l.b16 %v150
    %v674 = vunpack.c.l.b16 %v151
    %v675 = vunpack.c.l.b16 %v152
    %v676 = vunpack.c.l.b16 %v153
    %v677 = vunpack.c.l.b16 %v154
    %v678 = vunpack.c.l.b16 %v155
    %v679 = vunpack.c.l.b16 %v156
    %v680 = vunpack.c.l.b16 %v157
    %v681 = vunpack.c.l.b16 %v158
    %v682 = vunpack.c.l.b16 %v159
    %v683 = vunpack.c.l.b16 %v160
    %v684 = vunpack.c.l.b16 %v161
    %v685 = vunpack.c.l.b16 %v162
    %v686 = vunpack.c.l.b16 %v163
    %v687 = vunpack.c.l.b16 %v164
    %v688 = vunpack.c.l.b16 %v165
    %v689 = vunpack.c.l.b16 %v166
    %v690 = vunpack.c.l.b16 %v167
    %v691 = vunpack.c.l.b16 %v168
    %v692 = vunpack.c.l.b16 %v169
    %v693 = vunpack.c.l.b16 %v170
    %v694 = vunpack.c.l.b16 %v171
    %v695 = vunpack.c.l.b16 %v172
    %v696 = vunpack.c.l.b16 %v173
    %v697 = vunpack.c.l.b16 %v174
    %v698 = vunpack.c.l.b16 %v175
    %v699 = vunpack.c.l.b16 %v176
    %v700 = vunpack.c.l.b16 %v177
    %v701 = vunpack.c.l.b16 %v178
    %v702 = vunpack.c.l.b16 %v179
    %v703 = vunpack.c.l.b16 %v180
    %v704 = vunpack.c.l.b16 %v181
    %v705 = vunpack.c.l.b16 %v182
    %v706 = vunpack.c.l.b16 %v183
    %v707 = vunpack.c.l.b16 %v184
    %v708 = vunpack.c.l.b16 %v185
    %v709 = vunpack.c.l.b16 %v186
    %v710 = vunpack.c.l.b16 %v187
    %v711 = vunpack.c.l.b16 %v188
    %v712 = vunpack.c.l.b16 %v189
    %v713 = vunpack.c.l.b16 %v190
    %v714 = vunpack.c.l.b16 %v191
    %v715 = vunpack.c.l.b16 %v192
    %v716 = vunpack.c.l.b16 %v193
    %v717 = vunpack.c.l.b16 %v194
    %v718 = vunpack.c.l.b16 %v195
    %v719 = vunpack.c.l.b16 %v196
    %v720 = vunpack.c.l.b16 %v197
    %v721 = vunpack.c.l.b16 %v198
    %v722 = vunpack.c.l.b16 %v199
    %v723 = vunpack.c.l.b16 %v200
    %v724 = vunpack.c.l.b16 %v201
    %v725 = vunpack.c.l.b16 %v202
    %v726 = vunpack.c.l.b16 %v203
    %v727 = vunpack.c.l.b16 %v204
    %v728 = vunpack.c.l.b16 %v205
    %v729 = vunpack.c.l.b16 %v206
    %v730 = vunpack.c.l.b16 %v207
    %v731 = vunpack.c.l.b16 %v208
    %v732 = vunpack.c.l.b16 %v209
    %v733 = vunpack.c.l.b16 %v210
    %v734 = vunpack.c.l.b16 %v211
    %v735 = vunpack.c.l.b16 %v212
    %v736 = vunpack.c.l.b16 %v213
    %v737 = vunpack.c.l.b16 %v214
    %v738 = vunpack.c.l.b16 %v215
    %v739 = vunpack.c.l.b16 %v216
    %v740 = vunpack.c.l.b16 %v217
    %v741 = vunpack.c.l.b16 %v218
    %v742 = vunpack.c.l.b16 %v219
    %v743 = vunpack.c.l.b16 %v220
    %v744 = vunpack.c.l.b16 %v221
    %v745 = vunpack.c.l.b16 %v222
    %v746 = vunpack.c.l.b16 %v223
    %v747 = vunpack.c.l.b16 %v224
    %v748 = vunpack.c.l.b16 %v225
    %v749 = vunpack.c.l.b16 %v226
    %v750 = vunpack.c.l.b16 %v227
    %v751 = vunpack.c.l.b16 %v228
    %v752 = vunpack.c.l.b16 %v229
    %v753 = vunpack.c.l.b16 %v230
    %v754 = vunpack.c.l.b16 %v231
    %v755 = vunpack.c.l.b16 %v232
    %v756 = vunpack.c.l.b16 %v233
    %v757 = vunpack.c.l.b16 %v234
    %v758 = vunpack.c.l.b16 %v235
    %v759 = vunpack.c.l.b16 %v236
    %v760 = vunpack.c.l.b16 %v237
    %v761 = vunpack.c.l.b16 %v238
    %v762 = vunpack.c.l.b16 %v239
    %v763 = vunpack.c.l.b16 %v240
    %v764 = vunpack.c.l.b16 %v241
    %v765 = vunpack.c.l.b16 %v242
    %v766 = vunpack.c.l.b16 %v243
    %v767 = vunpack.c.l.b16 %v244
    %v768 = vunpack.c.l.b16 %v245
    %v769 = vunpack.c.l.b16 %v246
    %v770 = vunpack.c.l.b16 %v247
    %v771 = vunpack.c.l.b16 %v248
    %v772 = vunpack.c.l.b16 %v249
    %v773 = vunpack.c.l.b16 %v250
    %v774 = vunpack.c.l.b16 %v251
    %v775 = vunpack.c.l.b16 %v252
    %v776 = vunpack.c.l.b16 %v253
    %v777 = vunpack.c.l.b16 %v254
    %v778 = vunpack.c.l.b16 %v255
    %v779 = vunpack.c.l.b16 %v256
    %v780 = vunpack.c.l.b16 %v257
    %v781 = vunpack.c.l.b16 %v258
    %v782 = vunpack.c.l.b16 %v259
    %v783 = vunpack.c.l.b16 %v260
    %v784 = vunpack.c.l.b16 %v261
    %v785 = vunpack.c.l.b16 %v262
    %v786 = vunpack.c.l.b16 %v263
    %v787 = vunpack.c.l.b16 %v264
    %v788 = vunpack.c.l.b16 %v265
    %v789 = vunpack.c.l.b16 %v266
    %v790 = vunpack.c.l.b16 %v267
    %v791 = vunpack.c.l.b16 %v268
    %v792 = vunpack.c.l.b16 %v269
    %v793 = vunpack.c.l.b16 %v270
    %v794 = vunpack.c.l.b16 %v271
    %v795 = vunpack.c.l.b16 %v272
    %v796 = vunpack.c.l.b16 %v273
    %v797 = vunpack.c.l.b16 %v274
    %v798 = vunpack.c.l.b16 %v275
    %v799 = vunpack.c.l.b16 %v276
    %v800 = vunpack.c.l.b16 %v277
    %v801 = vunpack.c.l.b16 %v278
    %v802 = vunpack.c.l.b16 %v279
    %v803 = vunpack.c.l.b16 %v280
    %v804 = vunpack.c.l.b16 %v281
    %v805 = vunpack.c.l.b16 %v282
    %v806 = vunpack.c.l.b16 %v283
    %v807 = vunpack.c.l.b16 %v284
    %v808 = vunpack.c.l.b16 %v285
    %v809 = vunpack.c.l.b16 %v286
    %v810 = vpack.c.b16 %v555, %v554
    %v811 = vpack.c.b16 %v557, %v556
    %v812 = vpack.c.b16 %v559, %v558
    %v813 = vpack.c.b16 %v561, %v560
    %v814 = vpack.c.b16 %v563, %v562
    %v815 = vpack.c.b16 %v565, %v564
    %v816 = vpack.c.b16 %v567, %v566
    %v817 = vpack.c.b16 %v569, %v568
    %v818 = vpack.c.b16 %v571, %v570
    %v819 = vpack.c.b16 %v573, %v572
    %v820 = vpack.c.b16 %v575, %v574
    %v821 = vpack.c.b16 %v577, %v576
    %v822 = vpack.c.b16 %v579, %v578
    %v823 = vpack.c.b16 %v581, %v580
    %v824 = vpack.c.b16 %v583, %v582
    %v825 = vpack.c.b16 %v585, %v584
    %v826 = vpack.c.b16 %v587, %v586
    %v827 = vpack.c.b16 %v589, %v588
    %v828 = vpack.c.b16 %v591, %v590
    %v829 = vpack.c.b16 %v593, %v592
    %v830 = vpack.c.b16 %v595, %v594
    %v831 = vpack.c.b16 %v597, %v596
    %v832 = vpack.c.b16 %v599, %v598
    %v833 = vpack.c.b16 %v601, %v600
    %v834 = vpack.c.b16 %v603, %v602
    %v835 = vpack.c.b16 %v605, %v604
    %v836 = vpack.c.b16 %v607, %v606
    %v837 = vpack.c.b16 %v609, %v608
    %v838 = vpack.c.b16 %v611, %v610
    %v839 = vpack.c.b16 %v613, %v612
    %v840 = vpack.c.b16 %v615, %v614
    %v841 = vpack.c.b16 %v617, %v616
    %v842 = vpack.c.b16 %v619, %v618
    %v843 = vpack.c.b16 %v621, %v620
    %v844 = vpack.c.b16 %v623, %v622
    %v845 = vpack.c.b16 %v625, %v624
    %v846 = vpack.c.b16 %v627, %v626
    %v847 = vpack.c.b16 %v629, %v628
    %v848 = vpack.c.b16 %v631, %v630
    %v849 = vpack.c.b16 %v633, %v632
    %v850 = vpack.c.b16 %v635, %v634
    %v851 = vpack.c.b16 %v637, %v636
    %v852 = vpack.c.b16 %v639, %v638
    %v853 = vpack.c.b16 %v641, %v640
    %v854 = vpack.c.b16 %v643, %v642
    %v855 = vpack.c.b16 %v645, %v644
    %v856 = vpack.c.b16 %v647, %v646
    %v857 = vpack.c.b16 %v649, %v648
    %v858 = vpack.c.b16 %v651, %v650
    %v859 = vpack.c.b16 %v653, %v652
    %v860 = vpack.c.b16 %v655, %v654
    %v861 = vpack.c.b16 %v657, %v656
    %v862 = vpack.c.b16 %v659, %v658
    %v863 = vpack.c.b16 %v661, %v660
    %v864 = vpack.c.b16 %v663, %v662
    %v865 = vpack.c.b16 %v665, %v664
    %v866 = vpack.c.b16 %v667, %v666
    %v867 = vpack.c.b16 %v669, %v668
    %v868 = vpack.c.b16 %v671, %v670
    %v869 = vpack.c.b16 %v673, %v672
    %v870 = vpack.c.b16 %v675, %v674
    %v871 = vpack.c.b16 %v677, %v676
    %v872 = vpack.c.b16 %v679, %v678
    %v873 = vpack.c.b16 %v681, %v680
    %v874 = vpack.c.b16 %v683, %v682
    %v875 = vpack.c.b16 %v685, %v684
    %v876 = vpack.c.b16 %v687, %v686
    %v877 = vpack.c.b16 %v689, %v688
    %v878 = vpack.c.b16 %v691, %v690
    %v879 = vpack.c.b16 %v693, %v692
    %v880 = vpack.c.b16 %v695, %v694
    %v881 = vpack.c.b16 %v697, %v696
    %v882 = vpack.c.b16 %v699, %v698
    %v883 = vpack.c.b16 %v701, %v700
    %v884 = vpack.c.b16 %v703, %v702
    %v885 = vpack.c.b16 %v705, %v704
    %v886 = vpack.c.b16 %v707, %v706
    %v887 = vpack.c.b16 %v709, %v708
    %v888 = vpack.c.b16 %v711, %v710
    %v889 = vpack.c.b16 %v713, %v712
    %v890 = vpack.c.b16 %v715, %v714
    %v891 = vpack.c.b16 %v717, %v716
    %v892 = vpack.c.b16 %v719, %v718
    %v893 = vpack.c.b16 %v721, %v720
    %v894 = vpack.c.b16 %v723, %v722
    %v895 = vpack.c.b16 %v725, %v724
    %v896 = vpack.c.b16 %v727, %v726
    %v897 = vpack.c.b16 %v729, %v728
    %v898 = vpack.c.b16 %v731, %v730
    %v899 = vpack.c.b16 %v733, %v732
    %v900 = vpack.c.b16 %v735, %v734
    %v901 = vpack.c.b16 %v737, %v736
    %v902 = vpack.c.b16 %v739, %v738
    %v903 = vpack.c.b16 %v741, %v740
    %v904 = vpack.c.b16 %v743, %v742
    %v905 = vpack.c.b16 %v745, %v744
    %v906 = vpack.c.b16 %v747, %v746
    %v907 = vpack.c.b16 %v749, %v748
    %v908 = vpack.c.b16 %v751, %v750
    %v909 = vpack.c.b16 %v753, %v752
    %v910 = vpack.c.b16 %v755, %v754
    %v911 = vpack.c.b16 %v757, %v756
    %v912 = vpack.c.b16 %v759, %v758
    %v913 = vpack.c.b16 %v761, %v760
    %v914 = vpack.c.b16 %v763, %v762
    %v915 = vpack.c.b16 %v765, %v764
    %v916 = vpack.c.b16 %v767, %v766
    %v917 = vpack.c.b16 %v769, %v768
    %v918 = vpack.c.b16 %v771, %v770
    %v919 = vpack.c.b16 %v773, %v772
    %v920 = vpack.c.b16 %v775, %v774
    %v921 = vpack.c.b16 %v777, %v776
    %v922 = vpack.c.b16 %v779, %v778
    %v923 = vpack.c.b16 %v781, %v780
    %v924 = vpack.c.b16 %v783, %v782
    %v925 = vpack.c.b16 %v785, %v784
    %v926 = vpack.c.b16 %v787, %v786
    %v927 = vpack.c.b16 %v789, %v788
    %v928 = vpack.c.b16 %v791, %v790
    %v929 = vpack.c.b16 %v793, %v792
    %v930 = vpack.c.b16 %v795, %v794
    %v931 = vpack.c.b16 %v797, %v796
    %v932 = vpack.c.b16 %v799, %v798
    %v933 = vpack.c.b16 %v801, %v800
    %v934 = vpack.c.b16 %v803, %v802
    %v935 = vpack.c.b16 %v805, %v804
    %v936 = vpack.c.b16 %v807, %v806
    %v937 = vpack.c.b16 %v809, %v808
    %v942 = vunpack.c.l.b16 %v287
    %v943 = vunpack.c.l.b16 %v288
    %v944 = vunpack.c.l.b16 %v289
    %v945 = vunpack.c.l.b16 %v290
    %v946 = vpack.c.b16 %v943, %v942
    %v947 = vpack.c.b16 %v945, %v944
    %vm950 = vcmask 261120
    %v952 = vsel %vm950, %v810, 0
    %v955 = vsel %vm950, %v811, 0
    %v958 = vsel %vm950, %v812, 0
    %v961 = vsel %vm950, %v813, 0
    %v964 = vsel %vm950, %v814, 0
    %v967 = vsel %vm950, %v815, 0
    %v970 = vsel %vm950, %v816, 0
    %v973 = vsel %vm950, %v817, 0
    %v976 = vsel %vm950, %v818, 0
    %v979 = vsel %vm950, %v819, 0
    %v982 = vsel %vm950, %v820, 0
    %v985 = vsel %vm950, %v821, 0
    %v988 = vsel %vm950, %v822, 0
    %v991 = vsel %vm950, %v823, 0
    %v994 = vsel %vm950, %v824, 0
    %v997 = vsel %vm950, %v825, 0
    %v1000 = vsel %vm950, %v826, 0
    %v1003 = vsel %vm950, %v827, 0
    %v1006 = vsel %vm950, %v828, 0
    %v1009 = vsel %vm950, %v829, 0
    %v1012 = vsel %vm950, %v830, 0
    %v1015 = vsel %vm950, %v831, 0
    %v1018 = vsel %vm950, %v832, 0
    %v1021 = vsel %vm950, %v833, 0
    %v1024 = vsel %vm950, %v834, 0
    %v1027 = vsel %vm950, %v835, 0
    %v1030 = vsel %vm950, %v836, 0
    %v1033 = vsel %vm950, %v837, 0
    %v1036 = vsel %vm950, %v838, 0
    %v1039 = vsel %vm950, %v839, 0
    %v1042 = vsel %vm950, %v840, 0
    %v1045 = vsel %vm950, %v841, 0
    %v1048 = vsel %vm950, %v842, 0
    %v1051 = vsel %vm950, %v843, 0
    %v1054 = vsel %vm950, %v844, 0
    %v1057 = vsel %vm950, %v845, 0
    %v1060 = vsel %vm950, %v846, 0
    %v1063 = vsel %vm950, %v847, 0
    %v1066 = vsel %vm950, %v848, 0
    %v1069 = vsel %vm950, %v849, 0
    %v1072 = vsel %vm950, %v850, 0
    %v1075 = vsel %vm950, %v851, 0
    %v1078 = vsel %vm950, %v852, 0
    %v1081 = vsel %vm950, %v853, 0
    %v1084 = vsel %vm950, %v854, 0
    %v1087 = vsel %vm950, %v855, 0
    %v1090 = vsel %vm950, %v856, 0
    %v1093 = vsel %vm950, %v857, 0
    %v1096 = vsel %vm950, %v858, 0
    %v1099 = vsel %vm950, %v859, 0
    %v1102 = vsel %vm950, %v860, 0
    %v1105 = vsel %vm950, %v861, 0
    %v1108 = vsel %vm950, %v862, 0
    %v1111 = vsel %vm950, %v863, 0
    %v1114 = vsel %vm950, %v864, 0
    %v1117 = vsel %vm950, %v865, 0
    %v1120 = vsel %vm950, %v866, 0
    %v1123 = vsel %vm950, %v867, 0
    %v1126 = vsel %vm950, %v868, 0
    %v1129 = vsel %vm950, %v869, 0
    %v1132 = vsel %vm950, %v870, 0
    %v1135 = vsel %vm950, %v871, 0
    %v1138 = vsel %vm950, %v872, 0
    %v1141 = vsel %vm950, %v873, 0
    %v1144 = vsel %vm950, %v874, 0
    %v1147 = vsel %vm950, %v875, 0
    %v1150 = vsel %vm950, %v876, 0
    %v1153 = vsel %vm950, %v877, 0
    %v1156 = vsel %vm950, %v878, 0
    %v1159 = vsel %vm950, %v879, 0
    %v1162 = vsel %vm950, %v880, 0
    %v1165 = vsel %vm950, %v881, 0
    %v1168 = vsel %vm950, %v882, 0
    %v1171 = vsel %vm950, %v883, 0
    %v1174 = vsel %vm950, %v884, 0
    %v1177 = vsel %vm950, %v885, 0
    %v1180 = vsel %vm950, %v886, 0
    %v1183 = vsel %vm950, %v887, 0
    %v1186 = vsel %vm950, %v888, 0
    %v1189 = vsel %vm950, %v889, 0
    %v1192 = vsel %vm950, %v890, 0
    %v1195 = vsel %vm950, %v891, 0
    %v1198 = vsel %vm950, %v892, 0
    %v1201 = vsel %vm950, %v893, 0
    %v1204 = vsel %vm950, %v894, 0
    %v1207 = vsel %vm950, %v895, 0
    %v1210 = vsel %vm950, %v896, 0
    %v1213 = vsel %vm950, %v897, 0
    %v1216 = vsel %vm950, %v898, 0
    %v1219 = vsel %vm950, %v899, 0
    %v1222 = vsel %vm950, %v900, 0
    %v1225 = vsel %vm950, %v901, 0
    %v1228 = vsel %vm950, %v902, 0
    %v1231 = vsel %vm950, %v903, 0
    %v1234 = vsel %vm950, %v904, 0
    %v1237 = vsel %vm950, %v905, 0
    %v1240 = vsel %vm950, %v906, 0
    %v1243 = vsel %vm950, %v907, 0
    %v1246 = vsel %vm950, %v908, 0
    %v1249 = vsel %vm950, %v909, 0
    %v1252 = vsel %vm950, %v910, 0
    %v1255 = vsel %vm950, %v911, 0
    %v1258 = vsel %vm950, %v912, 0
    %v1261 = vsel %vm950, %v913, 0
    %v1264 = vsel %vm950, %v914, 0
    %v1267 = vsel %vm950, %v915, 0
    %v1270 = vsel %vm950, %v916, 0
    %v1273 = vsel %vm950, %v917, 0
    %v1276 = vsel %vm950, %v918, 0
    %v1279 = vsel %vm950, %v919, 0
    %v1282 = vsel %vm950, %v920, 0
    %v1285 = vsel %vm950, %v921, 0
    %v1288 = vsel %vm950, %v922, 0
    %v1291 = vsel %vm950, %v923, 0
    %v1294 = vsel %vm950, %v924, 0
    %v1297 = vsel %vm950, %v925, 0
    %v1300 = vsel %vm950, %v926, 0
    %v1303 = vsel %vm950, %v927, 0
    %v1306 = vsel %vm950, %v928, 0
    %v1309 = vsel %vm950, %v929, 0
    %v1312 = vsel %vm950, %v930, 0
    %v1315 = vsel %vm950, %v931, 0
    %v1318 = vsel %vm950, %v932, 0
    %v1321 = vsel %vm950, %v933, 0
    %v1324 = vsel %vm950, %v934, 0
    %v1327 = vsel %vm950, %v935, 0
    %v1330 = vsel %vm950, %v936, 0
    %v1333 = vsel %vm950, %v937, 0
    %1335 = vmatprep.subr.bf16.mxu0 0
    %1336 = vmatpush1.bf16.msra.mxu0 0
    %1337 = vmatprep.subr.bf16.mxu0 0
    %1338 = vmatpush1.bf16.msra.mxu0 0
    %1339 = vmatprep.subr.bf16.mxu0 0
    %1340 = vmatpush1.bf16.msra.mxu0 0
    %1341 = vmatprep.subr.bf16.mxu0 0
    %1342 = vmatpush1.bf16.msra.mxu0 0
    %1343 = vmatprep.subr.bf16.mxu0 0
    %1344 = vmatpush1.bf16.msra.mxu0 0
    %1345 = vmatprep.subr.bf16.mxu0 0
    %1346 = vmatpush1.bf16.msra.mxu0 0
    %1347 = vmatprep.subr.bf16.mxu0 0
    %1348 = vmatpush1.bf16.msra.mxu0 %v947
    %1349 = vmatprep.subr.bf16.mxu0 0
    %1350 = vmatpush1.bf16.msra.mxu0 %v946
    %1351 = vmatprep.subr.bf16.mxu0 0
    %1352 = vmatpush2.bf16.msra.mxu0 0
    %1353 = vmatprep.subr.bf16.mxu0 0
    %1354 = vmatpush2.bf16.msra.mxu0 0
    %1355 = vmatprep.subr.bf16.mxu0 0
    %1356 = vmatpush2.bf16.msra.mxu0 0
    %1357 = vmatprep.subr.bf16.mxu0 0
    %1358 = vmatpush2.bf16.msra.mxu0 0
    %1359 = vmatprep.subr.bf16.mxu0 0
    %1360 = vmatpush2.bf16.msra.mxu0 0
    %1361 = vmatprep.subr.bf16.mxu0 0
    %1362 = vmatpush2.bf16.msra.mxu0 0
    %1363 = vmatprep.subr.bf16.mxu0 0
    %1364 = vmatpush2.bf16.msra.mxu0 0
    %1365 = vmatprep.subr.bf16.mxu0 0
    %1366 = vmatpush2.bf16.msra.mxu0 0
    %1367 = vmatprep.mubr.bf16.mxu0 0
    %1368 = vmatmul.mubr.bf16.gmra.mxu0 %v952
    %v1369 = vpop.f32.mrf.mxu0
    %v1370 = vadd.f32 %v296, %v1369
    %v1371 = vpop.f32.mrf.mxu0
    %v1372 = vpop.f32.mrf.mxu0
    %v1373 = vadd.f32 %v296, %v1372
    %v1374 = vpop.f32.mrf.mxu0
    %1375 = vmatprep.mubr.bf16.mxu0 0
    %1376 = vmatmul.mubr.bf16.gmra.mxu0 %v955
    %v1377 = vpop.f32.mrf.mxu0
    %v1378 = vadd.f32 %v296, %v1377
    %v1379 = vpop.f32.mrf.mxu0
    %v1380 = vpop.f32.mrf.mxu0
    %v1381 = vadd.f32 %v296, %v1380
    %v1382 = vpop.f32.mrf.mxu0
    %1383 = vmatprep.mubr.bf16.mxu0 0
    %1384 = vmatmul.mubr.bf16.gmra.mxu0 %v958
    %v1385 = vpop.f32.mrf.mxu0
    %v1386 = vadd.f32 %v296, %v1385
    %v1387 = vpop.f32.mrf.mxu0
    %v1388 = vpop.f32.mrf.mxu0
    %v1389 = vadd.f32 %v296, %v1388
    %v1390 = vpop.f32.mrf.mxu0
    %1391 = vmatprep.mubr.bf16.mxu0 0
    %1392 = vmatmul.mubr.bf16.gmra.mxu0 %v961
    %v1393 = vpop.f32.mrf.mxu0
    %v1394 = vadd.f32 %v296, %v1393
    %v1395 = vpop.f32.mrf.mxu0
    %v1396 = vpop.f32.mrf.mxu0
    %v1397 = vadd.f32 %v296, %v1396
    %v1398 = vpop.f32.mrf.mxu0
    %1399 = vmatprep.mubr.bf16.mxu0 0
    %1400 = vmatmul.mubr.bf16.gmra.mxu0 %v964
    %v1401 = vpop.f32.mrf.mxu0
    %v1402 = vadd.f32 %v296, %v1401
    %v1403 = vpop.f32.mrf.mxu0
    %v1404 = vpop.f32.mrf.mxu0
    %v1405 = vadd.f32 %v296, %v1404
    %v1406 = vpop.f32.mrf.mxu0
    %1407 = vmatprep.mubr.bf16.mxu0 0
    %1408 = vmatmul.mubr.bf16.gmra.mxu0 %v967
    %v1409 = vpop.f32.mrf.mxu0
    %v1410 = vadd.f32 %v296, %v1409
    %v1411 = vpop.f32.mrf.mxu0
    %v1412 = vpop.f32.mrf.mxu0
    %v1413 = vadd.f32 %v296, %v1412
    %v1414 = vpop.f32.mrf.mxu0
    %1415 = vmatprep.mubr.bf16.mxu0 0
    %1416 = vmatmul.mubr.bf16.gmra.mxu0 %v970
    %v1417 = vpop.f32.mrf.mxu0
    %v1418 = vadd.f32 %v296, %v1417
    %v1419 = vpop.f32.mrf.mxu0
    %v1420 = vpop.f32.mrf.mxu0
    %v1421 = vadd.f32 %v296, %v1420
    %v1422 = vpop.f32.mrf.mxu0
    %1423 = vmatprep.mubr.bf16.mxu0 0
    %1424 = vmatmul.mubr.bf16.gmra.mxu0 %v973
    %v1425 = vpop.f32.mrf.mxu0
    %v1426 = vadd.f32 %v296, %v1425
    %v1427 = vpop.f32.mrf.mxu0
    %v1428 = vpop.f32.mrf.mxu0
    %v1429 = vadd.f32 %v296, %v1428
    %v1430 = vpop.f32.mrf.mxu0
    %1431 = vmatprep.mubr.bf16.mxu0 0
    %1432 = vmatmul.mubr.bf16.gmra.mxu0 %v976
    %v1433 = vpop.f32.mrf.mxu0
    %v1434 = vadd.f32 %v296, %v1433
    %v1435 = vpop.f32.mrf.mxu0
    %v1436 = vpop.f32.mrf.mxu0
    %v1437 = vadd.f32 %v296, %v1436
    %v1438 = vpop.f32.mrf.mxu0
    %1439 = vmatprep.mubr.bf16.mxu0 0
    %1440 = vmatmul.mubr.bf16.gmra.mxu0 %v979
    %v1441 = vpop.f32.mrf.mxu0
    %v1442 = vadd.f32 %v296, %v1441
    %v1443 = vpop.f32.mrf.mxu0
    %v1444 = vpop.f32.mrf.mxu0
    %v1445 = vadd.f32 %v296, %v1444
    %v1446 = vpop.f32.mrf.mxu0
    %1447 = vmatprep.mubr.bf16.mxu0 0
    %1448 = vmatmul.mubr.bf16.gmra.mxu0 %v982
    %v1449 = vpop.f32.mrf.mxu0
    %v1450 = vadd.f32 %v296, %v1449
    %v1451 = vpop.f32.mrf.mxu0
    %v1452 = vpop.f32.mrf.mxu0
    %v1453 = vadd.f32 %v296, %v1452
    %v1454 = vpop.f32.mrf.mxu0
    %1455 = vmatprep.mubr.bf16.mxu0 0
    %1456 = vmatmul.mubr.bf16.gmra.mxu0 %v985
    %v1457 = vpop.f32.mrf.mxu0
    %v1458 = vadd.f32 %v296, %v1457
    %v1459 = vpop.f32.mrf.mxu0
    %v1460 = vpop.f32.mrf.mxu0
    %v1461 = vadd.f32 %v296, %v1460
    %v1462 = vpop.f32.mrf.mxu0
    %1463 = vmatprep.mubr.bf16.mxu0 0
    %1464 = vmatmul.mubr.bf16.gmra.mxu0 %v988
    %v1465 = vpop.f32.mrf.mxu0
    %v1466 = vadd.f32 %v296, %v1465
    %v1467 = vpop.f32.mrf.mxu0
    %v1468 = vpop.f32.mrf.mxu0
    %v1469 = vadd.f32 %v296, %v1468
    %v1470 = vpop.f32.mrf.mxu0
    %1471 = vmatprep.mubr.bf16.mxu0 0
    %1472 = vmatmul.mubr.bf16.gmra.mxu0 %v991
    %v1473 = vpop.f32.mrf.mxu0
    %v1474 = vadd.f32 %v296, %v1473
    %v1475 = vpop.f32.mrf.mxu0
    %v1476 = vpop.f32.mrf.mxu0
    %v1477 = vadd.f32 %v296, %v1476
    %v1478 = vpop.f32.mrf.mxu0
    %1479 = vmatprep.mubr.bf16.mxu0 0
    %1480 = vmatmul.mubr.bf16.gmra.mxu0 %v994
    %v1481 = vpop.f32.mrf.mxu0
    %v1482 = vadd.f32 %v296, %v1481
    %v1483 = vpop.f32.mrf.mxu0
    %v1484 = vpop.f32.mrf.mxu0
    %v1485 = vadd.f32 %v296, %v1484
    %v1486 = vpop.f32.mrf.mxu0
    %1487 = vmatprep.mubr.bf16.mxu0 0
    %1488 = vmatmul.mubr.bf16.gmra.mxu0 %v997
    %v1489 = vpop.f32.mrf.mxu0
    %v1490 = vadd.f32 %v296, %v1489
    %v1491 = vpop.f32.mrf.mxu0
    %v1492 = vpop.f32.mrf.mxu0
    %v1493 = vadd.f32 %v296, %v1492
    %v1494 = vpop.f32.mrf.mxu0
    %1495 = vmatprep.mubr.bf16.mxu0 0
    %1496 = vmatmul.mubr.bf16.gmra.mxu0 %v1000
    %v1497 = vpop.f32.mrf.mxu0
    %v1498 = vadd.f32 %v296, %v1497
    %v1499 = vpop.f32.mrf.mxu0
    %v1500 = vpop.f32.mrf.mxu0
    %v1501 = vadd.f32 %v296, %v1500
    %v1502 = vpop.f32.mrf.mxu0
    %1503 = vmatprep.mubr.bf16.mxu0 0
    %1504 = vmatmul.mubr.bf16.gmra.mxu0 %v1003
    %v1505 = vpop.f32.mrf.mxu0
    %v1506 = vadd.f32 %v296, %v1505
    %v1507 = vpop.f32.mrf.mxu0
    %v1508 = vpop.f32.mrf.mxu0
    %v1509 = vadd.f32 %v296, %v1508
    %v1510 = vpop.f32.mrf.mxu0
    %1511 = vmatprep.mubr.bf16.mxu0 0
    %1512 = vmatmul.mubr.bf16.gmra.mxu0 %v1006
    %v1513 = vpop.f32.mrf.mxu0
    %v1514 = vadd.f32 %v296, %v1513
    %v1515 = vpop.f32.mrf.mxu0
    %v1516 = vpop.f32.mrf.mxu0
    %v1517 = vadd.f32 %v296, %v1516
    %v1518 = vpop.f32.mrf.mxu0
    %1519 = vmatprep.mubr.bf16.mxu0 0
    %1520 = vmatmul.mubr.bf16.gmra.mxu0 %v1009
    %v1521 = vpop.f32.mrf.mxu0
    %v1522 = vadd.f32 %v296, %v1521
    %v1523 = vpop.f32.mrf.mxu0
    %v1524 = vpop.f32.mrf.mxu0
    %v1525 = vadd.f32 %v296, %v1524
    %v1526 = vpop.f32.mrf.mxu0
    %1527 = vmatprep.mubr.bf16.mxu0 0
    %1528 = vmatmul.mubr.bf16.gmra.mxu0 %v1012
    %v1529 = vpop.f32.mrf.mxu0
    %v1530 = vadd.f32 %v296, %v1529
    %v1531 = vpop.f32.mrf.mxu0
    %v1532 = vpop.f32.mrf.mxu0
    %v1533 = vadd.f32 %v296, %v1532
    %v1534 = vpop.f32.mrf.mxu0
    %1535 = vmatprep.mubr.bf16.mxu0 0
    %1536 = vmatmul.mubr.bf16.gmra.mxu0 %v1015
    %v1537 = vpop.f32.mrf.mxu0
    %v1538 = vadd.f32 %v296, %v1537
    %v1539 = vpop.f32.mrf.mxu0
    %v1540 = vpop.f32.mrf.mxu0
    %v1541 = vadd.f32 %v296, %v1540
    %v1542 = vpop.f32.mrf.mxu0
    %1543 = vmatprep.mubr.bf16.mxu0 0
    %1544 = vmatmul.mubr.bf16.gmra.mxu0 %v1018
    %v1545 = vpop.f32.mrf.mxu0
    %v1546 = vadd.f32 %v296, %v1545
    %v1547 = vpop.f32.mrf.mxu0
    %v1548 = vpop.f32.mrf.mxu0
    %v1549 = vadd.f32 %v296, %v1548
    %v1550 = vpop.f32.mrf.mxu0
    %1551 = vmatprep.mubr.bf16.mxu0 0
    %1552 = vmatmul.mubr.bf16.gmra.mxu0 %v1021
    %v1553 = vpop.f32.mrf.mxu0
    %v1554 = vadd.f32 %v296, %v1553
    %v1555 = vpop.f32.mrf.mxu0
    %v1556 = vpop.f32.mrf.mxu0
    %v1557 = vadd.f32 %v296, %v1556
    %v1558 = vpop.f32.mrf.mxu0
    %1559 = vmatprep.mubr.bf16.mxu0 0
    %1560 = vmatmul.mubr.bf16.gmra.mxu0 %v1024
    %v1561 = vpop.f32.mrf.mxu0
    %v1562 = vadd.f32 %v296, %v1561
    %v1563 = vpop.f32.mrf.mxu0
    %v1564 = vpop.f32.mrf.mxu0
    %v1565 = vadd.f32 %v296, %v1564
    %v1566 = vpop.f32.mrf.mxu0
    %1567 = vmatprep.mubr.bf16.mxu0 0
    %1568 = vmatmul.mubr.bf16.gmra.mxu0 %v1027
    %v1569 = vpop.f32.mrf.mxu0
    %v1570 = vadd.f32 %v296, %v1569
    %v1571 = vpop.f32.mrf.mxu0
    %v1572 = vpop.f32.mrf.mxu0
    %v1573 = vadd.f32 %v296, %v1572
    %v1574 = vpop.f32.mrf.mxu0
    %1575 = vmatprep.mubr.bf16.mxu0 0
    %1576 = vmatmul.mubr.bf16.gmra.mxu0 %v1030
    %v1577 = vpop.f32.mrf.mxu0
    %v1578 = vadd.f32 %v296, %v1577
    %v1579 = vpop.f32.mrf.mxu0
    %v1580 = vpop.f32.mrf.mxu0
    %v1581 = vadd.f32 %v296, %v1580
    %v1582 = vpop.f32.mrf.mxu0
    %1583 = vmatprep.mubr.bf16.mxu0 0
    %1584 = vmatmul.mubr.bf16.gmra.mxu0 %v1033
    %v1585 = vpop.f32.mrf.mxu0
    %v1586 = vadd.f32 %v296, %v1585
    %v1587 = vpop.f32.mrf.mxu0
    %v1588 = vpop.f32.mrf.mxu0
    %v1589 = vadd.f32 %v296, %v1588
    %v1590 = vpop.f32.mrf.mxu0
    %1591 = vmatprep.mubr.bf16.mxu0 0
    %1592 = vmatmul.mubr.bf16.gmra.mxu0 %v1036
    %v1593 = vpop.f32.mrf.mxu0
    %v1594 = vadd.f32 %v296, %v1593
    %v1595 = vpop.f32.mrf.mxu0
    %v1596 = vpop.f32.mrf.mxu0
    %v1597 = vadd.f32 %v296, %v1596
    %v1598 = vpop.f32.mrf.mxu0
    %1599 = vmatprep.mubr.bf16.mxu0 0
    %1600 = vmatmul.mubr.bf16.gmra.mxu0 %v1039
    %v1601 = vpop.f32.mrf.mxu0
    %v1602 = vadd.f32 %v296, %v1601
    %v1603 = vpop.f32.mrf.mxu0
    %v1604 = vpop.f32.mrf.mxu0
    %v1605 = vadd.f32 %v296, %v1604
    %v1606 = vpop.f32.mrf.mxu0
    %1607 = vmatprep.mubr.bf16.mxu0 0
    %1608 = vmatmul.mubr.bf16.gmra.mxu0 %v1042
    %v1609 = vpop.f32.mrf.mxu0
    %v1610 = vadd.f32 %v296, %v1609
    %v1611 = vpop.f32.mrf.mxu0
    %v1612 = vpop.f32.mrf.mxu0
    %v1613 = vadd.f32 %v296, %v1612
    %v1614 = vpop.f32.mrf.mxu0
    %1615 = vmatprep.mubr.bf16.mxu0 0
    %1616 = vmatmul.mubr.bf16.gmra.mxu0 %v1045
    %v1617 = vpop.f32.mrf.mxu0
    %v1618 = vadd.f32 %v296, %v1617
    %v1619 = vpop.f32.mrf.mxu0
    %v1620 = vpop.f32.mrf.mxu0
    %v1621 = vadd.f32 %v296, %v1620
    %v1622 = vpop.f32.mrf.mxu0
    %1623 = vmatprep.mubr.bf16.mxu0 0
    %1624 = vmatmul.mubr.bf16.gmra.mxu0 %v1048
    %v1625 = vpop.f32.mrf.mxu0
    %v1626 = vadd.f32 %v296, %v1625
    %v1627 = vpop.f32.mrf.mxu0
    %v1628 = vpop.f32.mrf.mxu0
    %v1629 = vadd.f32 %v296, %v1628
    %v1630 = vpop.f32.mrf.mxu0
    %1631 = vmatprep.mubr.bf16.mxu0 0
    %1632 = vmatmul.mubr.bf16.gmra.mxu0 %v1051
    %v1633 = vpop.f32.mrf.mxu0
    %v1634 = vadd.f32 %v296, %v1633
    %v1635 = vpop.f32.mrf.mxu0
    %v1636 = vpop.f32.mrf.mxu0
    %v1637 = vadd.f32 %v296, %v1636
    %v1638 = vpop.f32.mrf.mxu0
    %1639 = vmatprep.mubr.bf16.mxu0 0
    %1640 = vmatmul.mubr.bf16.gmra.mxu0 %v1054
    %v1641 = vpop.f32.mrf.mxu0
    %v1642 = vadd.f32 %v296, %v1641
    %v1643 = vpop.f32.mrf.mxu0
    %v1644 = vpop.f32.mrf.mxu0
    %v1645 = vadd.f32 %v296, %v1644
    %v1646 = vpop.f32.mrf.mxu0
    %1647 = vmatprep.mubr.bf16.mxu0 0
    %1648 = vmatmul.mubr.bf16.gmra.mxu0 %v1057
    %v1649 = vpop.f32.mrf.mxu0
    %v1650 = vadd.f32 %v296, %v1649
    %v1651 = vpop.f32.mrf.mxu0
    %v1652 = vpop.f32.mrf.mxu0
    %v1653 = vadd.f32 %v296, %v1652
    %v1654 = vpop.f32.mrf.mxu0
    %1655 = vmatprep.mubr.bf16.mxu0 0
    %1656 = vmatmul.mubr.bf16.gmra.mxu0 %v1060
    %v1657 = vpop.f32.mrf.mxu0
    %v1658 = vadd.f32 %v296, %v1657
    %v1659 = vpop.f32.mrf.mxu0
    %v1660 = vpop.f32.mrf.mxu0
    %v1661 = vadd.f32 %v296, %v1660
    %v1662 = vpop.f32.mrf.mxu0
    %1663 = vmatprep.mubr.bf16.mxu0 0
    %1664 = vmatmul.mubr.bf16.gmra.mxu0 %v1063
    %v1665 = vpop.f32.mrf.mxu0
    %v1666 = vadd.f32 %v296, %v1665
    %v1667 = vpop.f32.mrf.mxu0
    %v1668 = vpop.f32.mrf.mxu0
    %v1669 = vadd.f32 %v296, %v1668
    %v1670 = vpop.f32.mrf.mxu0
    %1671 = vmatprep.mubr.bf16.mxu0 0
    %1672 = vmatmul.mubr.bf16.gmra.mxu0 %v1066
    %v1673 = vpop.f32.mrf.mxu0
    %v1674 = vadd.f32 %v296, %v1673
    %v1675 = vpop.f32.mrf.mxu0
    %v1676 = vpop.f32.mrf.mxu0
    %v1677 = vadd.f32 %v296, %v1676
    %v1678 = vpop.f32.mrf.mxu0
    %1679 = vmatprep.mubr.bf16.mxu0 0
    %1680 = vmatmul.mubr.bf16.gmra.mxu0 %v1069
    %v1681 = vpop.f32.mrf.mxu0
    %v1682 = vadd.f32 %v296, %v1681
    %v1683 = vpop.f32.mrf.mxu0
    %v1684 = vpop.f32.mrf.mxu0
    %v1685 = vadd.f32 %v296, %v1684
    %v1686 = vpop.f32.mrf.mxu0
    %1687 = vmatprep.mubr.bf16.mxu0 0
    %1688 = vmatmul.mubr.bf16.gmra.mxu0 %v1072
    %v1689 = vpop.f32.mrf.mxu0
    %v1690 = vadd.f32 %v296, %v1689
    %v1691 = vpop.f32.mrf.mxu0
    %v1692 = vpop.f32.mrf.mxu0
    %v1693 = vadd.f32 %v296, %v1692
    %v1694 = vpop.f32.mrf.mxu0
    %1695 = vmatprep.mubr.bf16.mxu0 0
    %1696 = vmatmul.mubr.bf16.gmra.mxu0 %v1075
    %v1697 = vpop.f32.mrf.mxu0
    %v1698 = vadd.f32 %v296, %v1697
    %v1699 = vpop.f32.mrf.mxu0
    %v1700 = vpop.f32.mrf.mxu0
    %v1701 = vadd.f32 %v296, %v1700
    %v1702 = vpop.f32.mrf.mxu0
    %1703 = vmatprep.mubr.bf16.mxu0 0
    %1704 = vmatmul.mubr.bf16.gmra.mxu0 %v1078
    %v1705 = vpop.f32.mrf.mxu0
    %v1706 = vadd.f32 %v296, %v1705
    %v1707 = vpop.f32.mrf.mxu0
    %v1708 = vpop.f32.mrf.mxu0
    %v1709 = vadd.f32 %v296, %v1708
    %v1710 = vpop.f32.mrf.mxu0
    %1711 = vmatprep.mubr.bf16.mxu0 0
    %1712 = vmatmul.mubr.bf16.gmra.mxu0 %v1081
    %v1713 = vpop.f32.mrf.mxu0
    %v1714 = vadd.f32 %v296, %v1713
    %v1715 = vpop.f32.mrf.mxu0
    %v1716 = vpop.f32.mrf.mxu0
    %v1717 = vadd.f32 %v296, %v1716
    %v1718 = vpop.f32.mrf.mxu0
    %1719 = vmatprep.mubr.bf16.mxu0 0
    %1720 = vmatmul.mubr.bf16.gmra.mxu0 %v1084
    %v1721 = vpop.f32.mrf.mxu0
    %v1722 = vadd.f32 %v296, %v1721
    %v1723 = vpop.f32.mrf.mxu0
    %v1724 = vpop.f32.mrf.mxu0
    %v1725 = vadd.f32 %v296, %v1724
    %v1726 = vpop.f32.mrf.mxu0
    %1727 = vmatprep.mubr.bf16.mxu0 0
    %1728 = vmatmul.mubr.bf16.gmra.mxu0 %v1087
    %v1729 = vpop.f32.mrf.mxu0
    %v1730 = vadd.f32 %v296, %v1729
    %v1731 = vpop.f32.mrf.mxu0
    %v1732 = vpop.f32.mrf.mxu0
    %v1733 = vadd.f32 %v296, %v1732
    %v1734 = vpop.f32.mrf.mxu0
    %1735 = vmatprep.mubr.bf16.mxu0 0
    %1736 = vmatmul.mubr.bf16.gmra.mxu0 %v1090
    %v1737 = vpop.f32.mrf.mxu0
    %v1738 = vadd.f32 %v296, %v1737
    %v1739 = vpop.f32.mrf.mxu0
    %v1740 = vpop.f32.mrf.mxu0
    %v1741 = vadd.f32 %v296, %v1740
    %v1742 = vpop.f32.mrf.mxu0
    %1743 = vmatprep.mubr.bf16.mxu0 0
    %1744 = vmatmul.mubr.bf16.gmra.mxu0 %v1093
    %v1745 = vpop.f32.mrf.mxu0
    %v1746 = vadd.f32 %v296, %v1745
    %v1747 = vpop.f32.mrf.mxu0
    %v1748 = vpop.f32.mrf.mxu0
    %v1749 = vadd.f32 %v296, %v1748
    %v1750 = vpop.f32.mrf.mxu0
    %1751 = vmatprep.mubr.bf16.mxu0 0
    %1752 = vmatmul.mubr.bf16.gmra.mxu0 %v1096
    %v1753 = vpop.f32.mrf.mxu0
    %v1754 = vadd.f32 %v296, %v1753
    %v1755 = vpop.f32.mrf.mxu0
    %v1756 = vpop.f32.mrf.mxu0
    %v1757 = vadd.f32 %v296, %v1756
    %v1758 = vpop.f32.mrf.mxu0
    %1759 = vmatprep.mubr.bf16.mxu0 0
    %1760 = vmatmul.mubr.bf16.gmra.mxu0 %v1099
    %v1761 = vpop.f32.mrf.mxu0
    %v1762 = vadd.f32 %v296, %v1761
    %v1763 = vpop.f32.mrf.mxu0
    %v1764 = vpop.f32.mrf.mxu0
    %v1765 = vadd.f32 %v296, %v1764
    %v1766 = vpop.f32.mrf.mxu0
    %1767 = vmatprep.mubr.bf16.mxu0 0
    %1768 = vmatmul.mubr.bf16.gmra.mxu0 %v1102
    %v1769 = vpop.f32.mrf.mxu0
    %v1770 = vadd.f32 %v296, %v1769
    %v1771 = vpop.f32.mrf.mxu0
    %v1772 = vpop.f32.mrf.mxu0
    %v1773 = vadd.f32 %v296, %v1772
    %v1774 = vpop.f32.mrf.mxu0
    %1775 = vmatprep.mubr.bf16.mxu0 0
    %1776 = vmatmul.mubr.bf16.gmra.mxu0 %v1105
    %v1777 = vpop.f32.mrf.mxu0
    %v1778 = vadd.f32 %v296, %v1777
    %v1779 = vpop.f32.mrf.mxu0
    %v1780 = vpop.f32.mrf.mxu0
    %v1781 = vadd.f32 %v296, %v1780
    %v1782 = vpop.f32.mrf.mxu0
    %1783 = vmatprep.mubr.bf16.mxu0 0
    %1784 = vmatmul.mubr.bf16.gmra.mxu0 %v1108
    %v1785 = vpop.f32.mrf.mxu0
    %v1786 = vadd.f32 %v296, %v1785
    %v1787 = vpop.f32.mrf.mxu0
    %v1788 = vpop.f32.mrf.mxu0
    %v1789 = vadd.f32 %v296, %v1788
    %v1790 = vpop.f32.mrf.mxu0
    %1791 = vmatprep.mubr.bf16.mxu0 0
    %1792 = vmatmul.mubr.bf16.gmra.mxu0 %v1111
    %v1793 = vpop.f32.mrf.mxu0
    %v1794 = vadd.f32 %v296, %v1793
    %v1795 = vpop.f32.mrf.mxu0
    %v1796 = vpop.f32.mrf.mxu0
    %v1797 = vadd.f32 %v296, %v1796
    %v1798 = vpop.f32.mrf.mxu0
    %1799 = vmatprep.mubr.bf16.mxu0 0
    %1800 = vmatmul.mubr.bf16.gmra.mxu0 %v1114
    %v1801 = vpop.f32.mrf.mxu0
    %v1802 = vadd.f32 %v296, %v1801
    %v1803 = vpop.f32.mrf.mxu0
    %v1804 = vpop.f32.mrf.mxu0
    %v1805 = vadd.f32 %v296, %v1804
    %v1806 = vpop.f32.mrf.mxu0
    %1807 = vmatprep.mubr.bf16.mxu0 0
    %1808 = vmatmul.mubr.bf16.gmra.mxu0 %v1117
    %v1809 = vpop.f32.mrf.mxu0
    %v1810 = vadd.f32 %v296, %v1809
    %v1811 = vpop.f32.mrf.mxu0
    %v1812 = vpop.f32.mrf.mxu0
    %v1813 = vadd.f32 %v296, %v1812
    %v1814 = vpop.f32.mrf.mxu0
    %1815 = vmatprep.mubr.bf16.mxu0 0
    %1816 = vmatmul.mubr.bf16.gmra.mxu0 %v1120
    %v1817 = vpop.f32.mrf.mxu0
    %v1818 = vadd.f32 %v296, %v1817
    %v1819 = vpop.f32.mrf.mxu0
    %v1820 = vpop.f32.mrf.mxu0
    %v1821 = vadd.f32 %v296, %v1820
    %v1822 = vpop.f32.mrf.mxu0
    %1823 = vmatprep.mubr.bf16.mxu0 0
    %1824 = vmatmul.mubr.bf16.gmra.mxu0 %v1123
    %v1825 = vpop.f32.mrf.mxu0
    %v1826 = vadd.f32 %v296, %v1825
    %v1827 = vpop.f32.mrf.mxu0
    %v1828 = vpop.f32.mrf.mxu0
    %v1829 = vadd.f32 %v296, %v1828
    %v1830 = vpop.f32.mrf.mxu0
    %1831 = vmatprep.mubr.bf16.mxu0 0
    %1832 = vmatmul.mubr.bf16.gmra.mxu0 %v1126
    %v1833 = vpop.f32.mrf.mxu0
    %v1834 = vadd.f32 %v296, %v1833
    %v1835 = vpop.f32.mrf.mxu0
    %v1836 = vpop.f32.mrf.mxu0
    %v1837 = vadd.f32 %v296, %v1836
    %v1838 = vpop.f32.mrf.mxu0
    %1839 = vmatprep.mubr.bf16.mxu0 0
    %1840 = vmatmul.mubr.bf16.gmra.mxu0 %v1129
    %v1841 = vpop.f32.mrf.mxu0
    %v1842 = vadd.f32 %v296, %v1841
    %v1843 = vpop.f32.mrf.mxu0
    %v1844 = vpop.f32.mrf.mxu0
    %v1845 = vadd.f32 %v296, %v1844
    %v1846 = vpop.f32.mrf.mxu0
    %1847 = vmatprep.mubr.bf16.mxu0 0
    %1848 = vmatmul.mubr.bf16.gmra.mxu0 %v1132
    %v1849 = vpop.f32.mrf.mxu0
    %v1850 = vadd.f32 %v296, %v1849
    %v1851 = vpop.f32.mrf.mxu0
    %v1852 = vpop.f32.mrf.mxu0
    %v1853 = vadd.f32 %v296, %v1852
    %v1854 = vpop.f32.mrf.mxu0
    %1855 = vmatprep.mubr.bf16.mxu0 0
    %1856 = vmatmul.mubr.bf16.gmra.mxu0 %v1135
    %v1857 = vpop.f32.mrf.mxu0
    %v1858 = vadd.f32 %v296, %v1857
    %v1859 = vpop.f32.mrf.mxu0
    %v1860 = vpop.f32.mrf.mxu0
    %v1861 = vadd.f32 %v296, %v1860
    %v1862 = vpop.f32.mrf.mxu0
    %1863 = vmatprep.mubr.bf16.mxu0 0
    %1864 = vmatmul.mubr.bf16.gmra.mxu0 %v1138
    %v1865 = vpop.f32.mrf.mxu0
    %v1866 = vadd.f32 %v296, %v1865
    %v1867 = vpop.f32.mrf.mxu0
    %v1868 = vpop.f32.mrf.mxu0
    %v1869 = vadd.f32 %v296, %v1868
    %v1870 = vpop.f32.mrf.mxu0
    %1871 = vmatprep.mubr.bf16.mxu0 0
    %1872 = vmatmul.mubr.bf16.gmra.mxu0 %v1141
    %v1873 = vpop.f32.mrf.mxu0
    %v1874 = vadd.f32 %v296, %v1873
    %v1875 = vpop.f32.mrf.mxu0
    %v1876 = vpop.f32.mrf.mxu0
    %v1877 = vadd.f32 %v296, %v1876
    %v1878 = vpop.f32.mrf.mxu0
    %1879 = vmatprep.mubr.bf16.mxu0 0
    %1880 = vmatmul.mubr.bf16.gmra.mxu0 %v1144
    %v1881 = vpop.f32.mrf.mxu0
    %v1882 = vadd.f32 %v296, %v1881
    %v1883 = vpop.f32.mrf.mxu0
    %v1884 = vpop.f32.mrf.mxu0
    %v1885 = vadd.f32 %v296, %v1884
    %v1886 = vpop.f32.mrf.mxu0
    %1887 = vmatprep.mubr.bf16.mxu0 0
    %1888 = vmatmul.mubr.bf16.gmra.mxu0 %v1147
    %v1889 = vpop.f32.mrf.mxu0
    %v1890 = vadd.f32 %v296, %v1889
    %v1891 = vpop.f32.mrf.mxu0
    %v1892 = vpop.f32.mrf.mxu0
    %v1893 = vadd.f32 %v296, %v1892
    %v1894 = vpop.f32.mrf.mxu0
    %1895 = vmatprep.mubr.bf16.mxu0 0
    %1896 = vmatmul.mubr.bf16.gmra.mxu0 %v1150
    %v1897 = vpop.f32.mrf.mxu0
    %v1898 = vadd.f32 %v296, %v1897
    %v1899 = vpop.f32.mrf.mxu0
    %v1900 = vpop.f32.mrf.mxu0
    %v1901 = vadd.f32 %v296, %v1900
    %v1902 = vpop.f32.mrf.mxu0
    %1903 = vmatprep.mubr.bf16.mxu0 0
    %1904 = vmatmul.mubr.bf16.gmra.mxu0 %v1153
    %v1905 = vpop.f32.mrf.mxu0
    %v1906 = vadd.f32 %v296, %v1905
    %v1907 = vpop.f32.mrf.mxu0
    %v1908 = vpop.f32.mrf.mxu0
    %v1909 = vadd.f32 %v296, %v1908
    %v1910 = vpop.f32.mrf.mxu0
    %1911 = vmatprep.mubr.bf16.mxu0 0
    %1912 = vmatmul.mubr.bf16.gmra.mxu0 %v1156
    %v1913 = vpop.f32.mrf.mxu0
    %v1914 = vadd.f32 %v296, %v1913
    %v1915 = vpop.f32.mrf.mxu0
    %v1916 = vpop.f32.mrf.mxu0
    %v1917 = vadd.f32 %v296, %v1916
    %v1918 = vpop.f32.mrf.mxu0
    %1919 = vmatprep.mubr.bf16.mxu0 0
    %1920 = vmatmul.mubr.bf16.gmra.mxu0 %v1159
    %v1921 = vpop.f32.mrf.mxu0
    %v1922 = vadd.f32 %v296, %v1921
    %v1923 = vpop.f32.mrf.mxu0
    %v1924 = vpop.f32.mrf.mxu0
    %v1925 = vadd.f32 %v296, %v1924
    %v1926 = vpop.f32.mrf.mxu0
    %1927 = vmatprep.mubr.bf16.mxu0 0
    %1928 = vmatmul.mubr.bf16.gmra.mxu0 %v1162
    %v1929 = vpop.f32.mrf.mxu0
    %v1930 = vadd.f32 %v296, %v1929
    %v1931 = vpop.f32.mrf.mxu0
    %v1932 = vpop.f32.mrf.mxu0
    %v1933 = vadd.f32 %v296, %v1932
    %v1934 = vpop.f32.mrf.mxu0
    %1935 = vmatprep.mubr.bf16.mxu0 0
    %1936 = vmatmul.mubr.bf16.gmra.mxu0 %v1165
    %v1937 = vpop.f32.mrf.mxu0
    %v1938 = vadd.f32 %v296, %v1937
    %v1939 = vpop.f32.mrf.mxu0
    %v1940 = vpop.f32.mrf.mxu0
    %v1941 = vadd.f32 %v296, %v1940
    %v1942 = vpop.f32.mrf.mxu0
    %1943 = vmatprep.mubr.bf16.mxu0 0
    %1944 = vmatmul.mubr.bf16.gmra.mxu0 %v1168
    %v1945 = vpop.f32.mrf.mxu0
    %v1946 = vadd.f32 %v296, %v1945
    %v1947 = vpop.f32.mrf.mxu0
    %v1948 = vpop.f32.mrf.mxu0
    %v1949 = vadd.f32 %v296, %v1948
    %v1950 = vpop.f32.mrf.mxu0
    %1951 = vmatprep.mubr.bf16.mxu0 0
    %1952 = vmatmul.mubr.bf16.gmra.mxu0 %v1171
    %v1953 = vpop.f32.mrf.mxu0
    %v1954 = vadd.f32 %v296, %v1953
    %v1955 = vpop.f32.mrf.mxu0
    %v1956 = vpop.f32.mrf.mxu0
    %v1957 = vadd.f32 %v296, %v1956
    %v1958 = vpop.f32.mrf.mxu0
    %1959 = vmatprep.mubr.bf16.mxu0 0
    %1960 = vmatmul.mubr.bf16.gmra.mxu0 %v1174
    %v1961 = vpop.f32.mrf.mxu0
    %v1962 = vadd.f32 %v296, %v1961
    %v1963 = vpop.f32.mrf.mxu0
    %v1964 = vpop.f32.mrf.mxu0
    %v1965 = vadd.f32 %v296, %v1964
    %v1966 = vpop.f32.mrf.mxu0
    %1967 = vmatprep.mubr.bf16.mxu0 0
    %1968 = vmatmul.mubr.bf16.gmra.mxu0 %v1177
    %v1969 = vpop.f32.mrf.mxu0
    %v1970 = vadd.f32 %v296, %v1969
    %v1971 = vpop.f32.mrf.mxu0
    %v1972 = vpop.f32.mrf.mxu0
    %v1973 = vadd.f32 %v296, %v1972
    %v1974 = vpop.f32.mrf.mxu0
    %1975 = vmatprep.mubr.bf16.mxu0 0
    %1976 = vmatmul.mubr.bf16.gmra.mxu0 %v1180
    %v1977 = vpop.f32.mrf.mxu0
    %v1978 = vadd.f32 %v296, %v1977
    %v1979 = vpop.f32.mrf.mxu0
    %v1980 = vpop.f32.mrf.mxu0
    %v1981 = vadd.f32 %v296, %v1980
    %v1982 = vpop.f32.mrf.mxu0
    %1983 = vmatprep.mubr.bf16.mxu0 0
    %1984 = vmatmul.mubr.bf16.gmra.mxu0 %v1183
    %v1985 = vpop.f32.mrf.mxu0
    %v1986 = vadd.f32 %v296, %v1985
    %v1987 = vpop.f32.mrf.mxu0
    %v1988 = vpop.f32.mrf.mxu0
    %v1989 = vadd.f32 %v296, %v1988
    %v1990 = vpop.f32.mrf.mxu0
    %1991 = vmatprep.mubr.bf16.mxu0 0
    %1992 = vmatmul.mubr.bf16.gmra.mxu0 %v1186
    %v1993 = vpop.f32.mrf.mxu0
    %v1994 = vadd.f32 %v296, %v1993
    %v1995 = vpop.f32.mrf.mxu0
    %v1996 = vpop.f32.mrf.mxu0
    %v1997 = vadd.f32 %v296, %v1996
    %v1998 = vpop.f32.mrf.mxu0
    %1999 = vmatprep.mubr.bf16.mxu0 0
    %2000 = vmatmul.mubr.bf16.gmra.mxu0 %v1189
    %v2001 = vpop.f32.mrf.mxu0
    %v2002 = vadd.f32 %v296, %v2001
    %v2003 = vpop.f32.mrf.mxu0
    %v2004 = vpop.f32.mrf.mxu0
    %v2005 = vadd.f32 %v296, %v2004
    %v2006 = vpop.f32.mrf.mxu0
    %2007 = vmatprep.mubr.bf16.mxu0 0
    %2008 = vmatmul.mubr.bf16.gmra.mxu0 %v1192
    %v2009 = vpop.f32.mrf.mxu0
    %v2010 = vadd.f32 %v296, %v2009
    %v2011 = vpop.f32.mrf.mxu0
    %v2012 = vpop.f32.mrf.mxu0
    %v2013 = vadd.f32 %v296, %v2012
    %v2014 = vpop.f32.mrf.mxu0
    %2015 = vmatprep.mubr.bf16.mxu0 0
    %2016 = vmatmul.mubr.bf16.gmra.mxu0 %v1195
    %v2017 = vpop.f32.mrf.mxu0
    %v2018 = vadd.f32 %v296, %v2017
    %v2019 = vpop.f32.mrf.mxu0
    %v2020 = vpop.f32.mrf.mxu0
    %v2021 = vadd.f32 %v296, %v2020
    %v2022 = vpop.f32.mrf.mxu0
    %2023 = vmatprep.mubr.bf16.mxu0 0
    %2024 = vmatmul.mubr.bf16.gmra.mxu0 %v1198
    %v2025 = vpop.f32.mrf.mxu0
    %v2026 = vadd.f32 %v296, %v2025
    %v2027 = vpop.f32.mrf.mxu0
    %v2028 = vpop.f32.mrf.mxu0
    %v2029 = vadd.f32 %v296, %v2028
    %v2030 = vpop.f32.mrf.mxu0
    %2031 = vmatprep.mubr.bf16.mxu0 0
    %2032 = vmatmul.mubr.bf16.gmra.mxu0 %v1201
    %v2033 = vpop.f32.mrf.mxu0
    %v2034 = vadd.f32 %v296, %v2033
    %v2035 = vpop.f32.mrf.mxu0
    %v2036 = vpop.f32.mrf.mxu0
    %v2037 = vadd.f32 %v296, %v2036
    %v2038 = vpop.f32.mrf.mxu0
    %2039 = vmatprep.mubr.bf16.mxu0 0
    %2040 = vmatmul.mubr.bf16.gmra.mxu0 %v1204
    %v2041 = vpop.f32.mrf.mxu0
    %v2042 = vadd.f32 %v296, %v2041
    %v2043 = vpop.f32.mrf.mxu0
    %v2044 = vpop.f32.mrf.mxu0
    %v2045 = vadd.f32 %v296, %v2044
    %v2046 = vpop.f32.mrf.mxu0
    %2047 = vmatprep.mubr.bf16.mxu0 0
    %2048 = vmatmul.mubr.bf16.gmra.mxu0 %v1207
    %v2049 = vpop.f32.mrf.mxu0
    %v2050 = vadd.f32 %v296, %v2049
    %v2051 = vpop.f32.mrf.mxu0
    %v2052 = vpop.f32.mrf.mxu0
    %v2053 = vadd.f32 %v296, %v2052
    %v2054 = vpop.f32.mrf.mxu0
    %2055 = vmatprep.mubr.bf16.mxu0 0
    %2056 = vmatmul.mubr.bf16.gmra.mxu0 %v1210
    %v2057 = vpop.f32.mrf.mxu0
    %v2058 = vadd.f32 %v296, %v2057
    %v2059 = vpop.f32.mrf.mxu0
    %v2060 = vpop.f32.mrf.mxu0
    %v2061 = vadd.f32 %v296, %v2060
    %v2062 = vpop.f32.mrf.mxu0
    %2063 = vmatprep.mubr.bf16.mxu0 0
    %2064 = vmatmul.mubr.bf16.gmra.mxu0 %v1213
    %v2065 = vpop.f32.mrf.mxu0
    %v2066 = vadd.f32 %v296, %v2065
    %v2067 = vpop.f32.mrf.mxu0
    %v2068 = vpop.f32.mrf.mxu0
    %v2069 = vadd.f32 %v296, %v2068
    %v2070 = vpop.f32.mrf.mxu0
    %2071 = vmatprep.mubr.bf16.mxu0 0
    %2072 = vmatmul.mubr.bf16.gmra.mxu0 %v1216
    %v2073 = vpop.f32.mrf.mxu0
    %v2074 = vadd.f32 %v296, %v2073
    %v2075 = vpop.f32.mrf.mxu0
    %v2076 = vpop.f32.mrf.mxu0
    %v2077 = vadd.f32 %v296, %v2076
    %v2078 = vpop.f32.mrf.mxu0
    %2079 = vmatprep.mubr.bf16.mxu0 0
    %2080 = vmatmul.mubr.bf16.gmra.mxu0 %v1219
    %v2081 = vpop.f32.mrf.mxu0
    %v2082 = vadd.f32 %v296, %v2081
    %v2083 = vpop.f32.mrf.mxu0
    %v2084 = vpop.f32.mrf.mxu0
    %v2085 = vadd.f32 %v296, %v2084
    %v2086 = vpop.f32.mrf.mxu0
    %2087 = vmatprep.mubr.bf16.mxu0 0
    %2088 = vmatmul.mubr.bf16.gmra.mxu0 %v1222
    %v2089 = vpop.f32.mrf.mxu0
    %v2090 = vadd.f32 %v296, %v2089
    %v2091 = vpop.f32.mrf.mxu0
    %v2092 = vpop.f32.mrf.mxu0
    %v2093 = vadd.f32 %v296, %v2092
    %v2094 = vpop.f32.mrf.mxu0
    %2095 = vmatprep.mubr.bf16.mxu0 0
    %2096 = vmatmul.mubr.bf16.gmra.mxu0 %v1225
    %v2097 = vpop.f32.mrf.mxu0
    %v2098 = vadd.f32 %v296, %v2097
    %v2099 = vpop.f32.mrf.mxu0
    %v2100 = vpop.f32.mrf.mxu0
    %v2101 = vadd.f32 %v296, %v2100
    %v2102 = vpop.f32.mrf.mxu0
    %2103 = vmatprep.mubr.bf16.mxu0 0
    %2104 = vmatmul.mubr.bf16.gmra.mxu0 %v1228
    %v2105 = vpop.f32.mrf.mxu0
    %v2106 = vadd.f32 %v296, %v2105
    %v2107 = vpop.f32.mrf.mxu0
    %v2108 = vpop.f32.mrf.mxu0
    %v2109 = vadd.f32 %v296, %v2108
    %v2110 = vpop.f32.mrf.mxu0
    %2111 = vmatprep.mubr.bf16.mxu0 0
    %2112 = vmatmul.mubr.bf16.gmra.mxu0 %v1231
    %v2113 = vpop.f32.mrf.mxu0
    %v2114 = vadd.f32 %v296, %v2113
    %v2115 = vpop.f32.mrf.mxu0
    %v2116 = vpop.f32.mrf.mxu0
    %v2117 = vadd.f32 %v296, %v2116
    %v2118 = vpop.f32.mrf.mxu0
    %2119 = vmatprep.mubr.bf16.mxu0 0
    %2120 = vmatmul.mubr.bf16.gmra.mxu0 %v1234
    %v2121 = vpop.f32.mrf.mxu0
    %v2122 = vadd.f32 %v296, %v2121
    %v2123 = vpop.f32.mrf.mxu0
    %v2124 = vpop.f32.mrf.mxu0
    %v2125 = vadd.f32 %v296, %v2124
    %v2126 = vpop.f32.mrf.mxu0
    %2127 = vmatprep.mubr.bf16.mxu0 0
    %2128 = vmatmul.mubr.bf16.gmra.mxu0 %v1237
    %v2129 = vpop.f32.mrf.mxu0
    %v2130 = vadd.f32 %v296, %v2129
    %v2131 = vpop.f32.mrf.mxu0
    %v2132 = vpop.f32.mrf.mxu0
    %v2133 = vadd.f32 %v296, %v2132
    %v2134 = vpop.f32.mrf.mxu0
    %2135 = vmatprep.mubr.bf16.mxu0 0
    %2136 = vmatmul.mubr.bf16.gmra.mxu0 %v1240
    %v2137 = vpop.f32.mrf.mxu0
    %v2138 = vadd.f32 %v296, %v2137
    %v2139 = vpop.f32.mrf.mxu0
    %v2140 = vpop.f32.mrf.mxu0
    %v2141 = vadd.f32 %v296, %v2140
    %v2142 = vpop.f32.mrf.mxu0
    %2143 = vmatprep.mubr.bf16.mxu0 0
    %2144 = vmatmul.mubr.bf16.gmra.mxu0 %v1243
    %v2145 = vpop.f32.mrf.mxu0
    %v2146 = vadd.f32 %v296, %v2145
    %v2147 = vpop.f32.mrf.mxu0
    %v2148 = vpop.f32.mrf.mxu0
    %v2149 = vadd.f32 %v296, %v2148
    %v2150 = vpop.f32.mrf.mxu0
    %2151 = vmatprep.mubr.bf16.mxu0 0
    %2152 = vmatmul.mubr.bf16.gmra.mxu0 %v1246
    %v2153 = vpop.f32.mrf.mxu0
    %v2154 = vadd.f32 %v296, %v2153
    %v2155 = vpop.f32.mrf.mxu0
    %v2156 = vpop.f32.mrf.mxu0
    %v2157 = vadd.f32 %v296, %v2156
    %v2158 = vpop.f32.mrf.mxu0
    %2159 = vmatprep.mubr.bf16.mxu0 0
    %2160 = vmatmul.mubr.bf16.gmra.mxu0 %v1249
    %v2161 = vpop.f32.mrf.mxu0
    %v2162 = vadd.f32 %v296, %v2161
    %v2163 = vpop.f32.mrf.mxu0
    %v2164 = vpop.f32.mrf.mxu0
    %v2165 = vadd.f32 %v296, %v2164
    %v2166 = vpop.f32.mrf.mxu0
    %2167 = vmatprep.mubr.bf16.mxu0 0
    %2168 = vmatmul.mubr.bf16.gmra.mxu0 %v1252
    %v2169 = vpop.f32.mrf.mxu0
    %v2170 = vadd.f32 %v296, %v2169
    %v2171 = vpop.f32.mrf.mxu0
    %v2172 = vpop.f32.mrf.mxu0
    %v2173 = vadd.f32 %v296, %v2172
    %v2174 = vpop.f32.mrf.mxu0
    %2175 = vmatprep.mubr.bf16.mxu0 0
    %2176 = vmatmul.mubr.bf16.gmra.mxu0 %v1255
    %v2177 = vpop.f32.mrf.mxu0
    %v2178 = vadd.f32 %v296, %v2177
    %v2179 = vpop.f32.mrf.mxu0
    %v2180 = vpop.f32.mrf.mxu0
    %v2181 = vadd.f32 %v296, %v2180
    %v2182 = vpop.f32.mrf.mxu0
    %2183 = vmatprep.mubr.bf16.mxu0 0
    %2184 = vmatmul.mubr.bf16.gmra.mxu0 %v1258
    %v2185 = vpop.f32.mrf.mxu0
    %v2186 = vadd.f32 %v296, %v2185
    %v2187 = vpop.f32.mrf.mxu0
    %v2188 = vpop.f32.mrf.mxu0
    %v2189 = vadd.f32 %v296, %v2188
    %v2190 = vpop.f32.mrf.mxu0
    %2191 = vmatprep.mubr.bf16.mxu0 0
    %2192 = vmatmul.mubr.bf16.gmra.mxu0 %v1261
    %v2193 = vpop.f32.mrf.mxu0
    %v2194 = vadd.f32 %v296, %v2193
    %v2195 = vpop.f32.mrf.mxu0
    %v2196 = vpop.f32.mrf.mxu0
    %v2197 = vadd.f32 %v296, %v2196
    %v2198 = vpop.f32.mrf.mxu0
    %2199 = vmatprep.mubr.bf16.mxu0 0
    %2200 = vmatmul.mubr.bf16.gmra.mxu0 %v1264
    %v2201 = vpop.f32.mrf.mxu0
    %v2202 = vadd.f32 %v296, %v2201
    %v2203 = vpop.f32.mrf.mxu0
    %v2204 = vpop.f32.mrf.mxu0
    %v2205 = vadd.f32 %v296, %v2204
    %v2206 = vpop.f32.mrf.mxu0
    %2207 = vmatprep.mubr.bf16.mxu0 0
    %2208 = vmatmul.mubr.bf16.gmra.mxu0 %v1267
    %v2209 = vpop.f32.mrf.mxu0
    %v2210 = vadd.f32 %v296, %v2209
    %v2211 = vpop.f32.mrf.mxu0
    %v2212 = vpop.f32.mrf.mxu0
    %v2213 = vadd.f32 %v296, %v2212
    %v2214 = vpop.f32.mrf.mxu0
    %2215 = vmatprep.mubr.bf16.mxu0 0
    %2216 = vmatmul.mubr.bf16.gmra.mxu0 %v1270
    %v2217 = vpop.f32.mrf.mxu0
    %v2218 = vadd.f32 %v296, %v2217
    %v2219 = vpop.f32.mrf.mxu0
    %v2220 = vpop.f32.mrf.mxu0
    %v2221 = vadd.f32 %v296, %v2220
    %v2222 = vpop.f32.mrf.mxu0
    %2223 = vmatprep.mubr.bf16.mxu0 0
    %2224 = vmatmul.mubr.bf16.gmra.mxu0 %v1273
    %v2225 = vpop.f32.mrf.mxu0
    %v2226 = vadd.f32 %v296, %v2225
    %v2227 = vpop.f32.mrf.mxu0
    %v2228 = vpop.f32.mrf.mxu0
    %v2229 = vadd.f32 %v296, %v2228
    %v2230 = vpop.f32.mrf.mxu0
    %2231 = vmatprep.mubr.bf16.mxu0 0
    %2232 = vmatmul.mubr.bf16.gmra.mxu0 %v1276
    %v2233 = vpop.f32.mrf.mxu0
    %v2234 = vadd.f32 %v296, %v2233
    %v2235 = vpop.f32.mrf.mxu0
    %v2236 = vpop.f32.mrf.mxu0
    %v2237 = vadd.f32 %v296, %v2236
    %v2238 = vpop.f32.mrf.mxu0
    %2239 = vmatprep.mubr.bf16.mxu0 0
    %2240 = vmatmul.mubr.bf16.gmra.mxu0 %v1279
    %v2241 = vpop.f32.mrf.mxu0
    %v2242 = vadd.f32 %v296, %v2241
    %v2243 = vpop.f32.mrf.mxu0
    %v2244 = vpop.f32.mrf.mxu0
    %v2245 = vadd.f32 %v296, %v2244
    %v2246 = vpop.f32.mrf.mxu0
    %2247 = vmatprep.mubr.bf16.mxu0 0
    %2248 = vmatmul.mubr.bf16.gmra.mxu0 %v1282
    %v2249 = vpop.f32.mrf.mxu0
    %v2250 = vadd.f32 %v296, %v2249
    %v2251 = vpop.f32.mrf.mxu0
    %v2252 = vpop.f32.mrf.mxu0
    %v2253 = vadd.f32 %v296, %v2252
    %v2254 = vpop.f32.mrf.mxu0
    %2255 = vmatprep.mubr.bf16.mxu0 0
    %2256 = vmatmul.mubr.bf16.gmra.mxu0 %v1285
    %v2257 = vpop.f32.mrf.mxu0
    %v2258 = vadd.f32 %v296, %v2257
    %v2259 = vpop.f32.mrf.mxu0
    %v2260 = vpop.f32.mrf.mxu0
    %v2261 = vadd.f32 %v296, %v2260
    %v2262 = vpop.f32.mrf.mxu0
    %2263 = vmatprep.mubr.bf16.mxu0 0
    %2264 = vmatmul.mubr.bf16.gmra.mxu0 %v1288
    %v2265 = vpop.f32.mrf.mxu0
    %v2266 = vadd.f32 %v296, %v2265
    %v2267 = vpop.f32.mrf.mxu0
    %v2268 = vpop.f32.mrf.mxu0
    %v2269 = vadd.f32 %v296, %v2268
    %v2270 = vpop.f32.mrf.mxu0
    %2271 = vmatprep.mubr.bf16.mxu0 0
    %2272 = vmatmul.mubr.bf16.gmra.mxu0 %v1291
    %v2273 = vpop.f32.mrf.mxu0
    %v2274 = vadd.f32 %v296, %v2273
    %v2275 = vpop.f32.mrf.mxu0
    %v2276 = vpop.f32.mrf.mxu0
    %v2277 = vadd.f32 %v296, %v2276
    %v2278 = vpop.f32.mrf.mxu0
    %2279 = vmatprep.mubr.bf16.mxu0 0
    %2280 = vmatmul.mubr.bf16.gmra.mxu0 %v1294
    %v2281 = vpop.f32.mrf.mxu0
    %v2282 = vadd.f32 %v296, %v2281
    %v2283 = vpop.f32.mrf.mxu0
    %v2284 = vpop.f32.mrf.mxu0
    %v2285 = vadd.f32 %v296, %v2284
    %v2286 = vpop.f32.mrf.mxu0
    %2287 = vmatprep.mubr.bf16.mxu0 0
    %2288 = vmatmul.mubr.bf16.gmra.mxu0 %v1297
    %v2289 = vpop.f32.mrf.mxu0
    %v2290 = vadd.f32 %v296, %v2289
    %v2291 = vpop.f32.mrf.mxu0
    %v2292 = vpop.f32.mrf.mxu0
    %v2293 = vadd.f32 %v296, %v2292
    %v2294 = vpop.f32.mrf.mxu0
    %2295 = vmatprep.mubr.bf16.mxu0 0
    %2296 = vmatmul.mubr.bf16.gmra.mxu0 %v1300
    %v2297 = vpop.f32.mrf.mxu0
    %v2298 = vadd.f32 %v296, %v2297
    %v2299 = vpop.f32.mrf.mxu0
    %v2300 = vpop.f32.mrf.mxu0
    %v2301 = vadd.f32 %v296, %v2300
    %v2302 = vpop.f32.mrf.mxu0
    %2303 = vmatprep.mubr.bf16.mxu0 0
    %2304 = vmatmul.mubr.bf16.gmra.mxu0 %v1303
    %v2305 = vpop.f32.mrf.mxu0
    %v2306 = vadd.f32 %v296, %v2305
    %v2307 = vpop.f32.mrf.mxu0
    %v2308 = vpop.f32.mrf.mxu0
    %v2309 = vadd.f32 %v296, %v2308
    %v2310 = vpop.f32.mrf.mxu0
    %2311 = vmatprep.mubr.bf16.mxu0 0
    %2312 = vmatmul.mubr.bf16.gmra.mxu0 %v1306
    %v2313 = vpop.f32.mrf.mxu0
    %v2314 = vadd.f32 %v296, %v2313
    %v2315 = vpop.f32.mrf.mxu0
    %v2316 = vpop.f32.mrf.mxu0
    %v2317 = vadd.f32 %v296, %v2316
    %v2318 = vpop.f32.mrf.mxu0
    %2319 = vmatprep.mubr.bf16.mxu0 0
    %2320 = vmatmul.mubr.bf16.gmra.mxu0 %v1309
    %v2321 = vpop.f32.mrf.mxu0
    %v2322 = vadd.f32 %v296, %v2321
    %v2323 = vpop.f32.mrf.mxu0
    %v2324 = vpop.f32.mrf.mxu0
    %v2325 = vadd.f32 %v296, %v2324
    %v2326 = vpop.f32.mrf.mxu0
    %2327 = vmatprep.mubr.bf16.mxu0 0
    %2328 = vmatmul.mubr.bf16.gmra.mxu0 %v1312
    %v2329 = vpop.f32.mrf.mxu0
    %v2330 = vadd.f32 %v296, %v2329
    %v2331 = vpop.f32.mrf.mxu0
    %v2332 = vpop.f32.mrf.mxu0
    %v2333 = vadd.f32 %v296, %v2332
    %v2334 = vpop.f32.mrf.mxu0
    %2335 = vmatprep.mubr.bf16.mxu0 0
    %2336 = vmatmul.mubr.bf16.gmra.mxu0 %v1315
    %v2337 = vpop.f32.mrf.mxu0
    %v2338 = vadd.f32 %v296, %v2337
    %v2339 = vpop.f32.mrf.mxu0
    %v2340 = vpop.f32.mrf.mxu0
    %v2341 = vadd.f32 %v296, %v2340
    %v2342 = vpop.f32.mrf.mxu0
    %2343 = vmatprep.mubr.bf16.mxu0 0
    %2344 = vmatmul.mubr.bf16.gmra.mxu0 %v1318
    %v2345 = vpop.f32.mrf.mxu0
    %v2346 = vadd.f32 %v296, %v2345
    %v2347 = vpop.f32.mrf.mxu0
    %v2348 = vpop.f32.mrf.mxu0
    %v2349 = vadd.f32 %v296, %v2348
    %v2350 = vpop.f32.mrf.mxu0
    %2351 = vmatprep.mubr.bf16.mxu0 0
    %2352 = vmatmul.mubr.bf16.gmra.mxu0 %v1321
    %v2353 = vpop.f32.mrf.mxu0
    %v2354 = vadd.f32 %v296, %v2353
    %v2355 = vpop.f32.mrf.mxu0
    %v2356 = vpop.f32.mrf.mxu0
    %v2357 = vadd.f32 %v296, %v2356
    %v2358 = vpop.f32.mrf.mxu0
    %2359 = vmatprep.mubr.bf16.mxu0 0
    %2360 = vmatmul.mubr.bf16.gmra.mxu0 %v1324
    %v2361 = vpop.f32.mrf.mxu0
    %v2362 = vadd.f32 %v296, %v2361
    %v2363 = vpop.f32.mrf.mxu0
    %v2364 = vpop.f32.mrf.mxu0
    %v2365 = vadd.f32 %v296, %v2364
    %v2366 = vpop.f32.mrf.mxu0
    %2367 = vmatprep.mubr.bf16.mxu0 0
    %2368 = vmatmul.mubr.bf16.gmra.mxu0 %v1327
    %v2369 = vpop.f32.mrf.mxu0
    %v2370 = vadd.f32 %v296, %v2369
    %v2371 = vpop.f32.mrf.mxu0
    %v2372 = vpop.f32.mrf.mxu0
    %v2373 = vadd.f32 %v296, %v2372
    %v2374 = vpop.f32.mrf.mxu0
    %2375 = vmatprep.mubr.bf16.mxu0 0
    %2376 = vmatmul.mubr.bf16.gmra.mxu0 %v1330
    %v2377 = vpop.f32.mrf.mxu0
    %v2378 = vadd.f32 %v296, %v2377
    %v2379 = vpop.f32.mrf.mxu0
    %v2380 = vpop.f32.mrf.mxu0
    %v2381 = vadd.f32 %v296, %v2380
    %v2382 = vpop.f32.mrf.mxu0
    %2383 = vmatprep.mubr.bf16.mxu0 0
    %2384 = vmatmul.mubr.bf16.gmra.mxu0 %v1333
    %v2385 = vpop.f32.mrf.mxu0
    %v2386 = vadd.f32 %v296, %v2385
    %v2387 = vpop.f32.mrf.mxu0
    %v2388 = vpop.f32.mrf.mxu0
    %v2389 = vadd.f32 %v296, %v2388
    %v2390 = vpop.f32.mrf.mxu0
    %2391 = vdwg.mxu0
    %v2392 = vmax.f32 %v1370, 0.0
    %v2393 = vmax.f32 %v1373, 0.0
    %v2394 = vmax.f32 %v1378, 0.0
    %v2395 = vmax.f32 %v1381, 0.0
    %v2396 = vmax.f32 %v1386, 0.0
    %v2397 = vmax.f32 %v1389, 0.0
    %v2398 = vmax.f32 %v1394, 0.0
    %v2399 = vmax.f32 %v1397, 0.0
    %v2400 = vmax.f32 %v1402, 0.0
    %v2401 = vmax.f32 %v1405, 0.0
    %v2402 = vmax.f32 %v1410, 0.0
    %v2403 = vmax.f32 %v1413, 0.0
    %v2404 = vmax.f32 %v1418, 0.0
    %v2405 = vmax.f32 %v1421, 0.0
    %v2406 = vmax.f32 %v1426, 0.0
    %v2407 = vmax.f32 %v1429, 0.0
    %v2408 = vmax.f32 %v1434, 0.0
    %v2409 = vmax.f32 %v1437, 0.0
    %v2410 = vmax.f32 %v1442, 0.0
    %v2411 = vmax.f32 %v1445, 0.0
    %v2412 = vmax.f32 %v1450, 0.0
    %v2413 = vmax.f32 %v1453, 0.0
    %v2414 = vmax.f32 %v1458, 0.0
    %v2415 = vmax.f32 %v1461, 0.0
    %v2416 = vmax.f32 %v1466, 0.0
    %v2417 = vmax.f32 %v1469, 0.0
    %v2418 = vmax.f32 %v1474, 0.0
    %v2419 = vmax.f32 %v1477, 0.0
    %v2420 = vmax.f32 %v1482, 0.0
    %v2421 = vmax.f32 %v1485, 0.0
    %v2422 = vmax.f32 %v1490, 0.0
    %v2423 = vmax.f32 %v1493, 0.0
    %v2424 = vmax.f32 %v1498, 0.0
    %v2425 = vmax.f32 %v1501, 0.0
    %v2426 = vmax.f32 %v1506, 0.0
    %v2427 = vmax.f32 %v1509, 0.0
    %v2428 = vmax.f32 %v1514, 0.0
    %v2429 = vmax.f32 %v1517, 0.0
    %v2430 = vmax.f32 %v1522, 0.0
    %v2431 = vmax.f32 %v1525, 0.0
    %v2432 = vmax.f32 %v1530, 0.0
    %v2433 = vmax.f32 %v1533, 0.0
    %v2434 = vmax.f32 %v1538, 0.0
    %v2435 = vmax.f32 %v1541, 0.0
    %v2436 = vmax.f32 %v1546, 0.0
    %v2437 = vmax.f32 %v1549, 0.0
    %v2438 = vmax.f32 %v1554, 0.0
    %v2439 = vmax.f32 %v1557, 0.0
    %v2440 = vmax.f32 %v1562, 0.0
    %v2441 = vmax.f32 %v1565, 0.0
    %v2442 = vmax.f32 %v1570, 0.0
    %v2443 = vmax.f32 %v1573, 0.0
    %v2444 = vmax.f32 %v1578, 0.0
    %v2445 = vmax.f32 %v1581, 0.0
    %v2446 = vmax.f32 %v1586, 0.0
    %v2447 = vmax.f32 %v1589, 0.0
    %v2448 = vmax.f32 %v1594, 0.0
    %v2449 = vmax.f32 %v1597, 0.0
    %v2450 = vmax.f32 %v1602, 0.0
    %v2451 = vmax.f32 %v1605, 0.0
    %v2452 = vmax.f32 %v1610, 0.0
    %v2453 = vmax.f32 %v1613, 0.0
    %v2454 = vmax.f32 %v1618, 0.0
    %v2455 = vmax.f32 %v1621, 0.0
    %v2456 = vmax.f32 %v1626, 0.0
    %v2457 = vmax.f32 %v1629, 0.0
    %v2458 = vmax.f32 %v1634, 0.0
    %v2459 = vmax.f32 %v1637, 0.0
    %v2460 = vmax.f32 %v1642, 0.0
    %v2461 = vmax.f32 %v1645, 0.0
    %v2462 = vmax.f32 %v1650, 0.0
    %v2463 = vmax.f32 %v1653, 0.0
    %v2464 = vmax.f32 %v1658, 0.0
    %v2465 = vmax.f32 %v1661, 0.0
    %v2466 = vmax.f32 %v1666, 0.0
    %v2467 = vmax.f32 %v1669, 0.0
    %v2468 = vmax.f32 %v1674, 0.0
    %v2469 = vmax.f32 %v1677, 0.0
    %v2470 = vmax.f32 %v1682, 0.0
    %v2471 = vmax.f32 %v1685, 0.0
    %v2472 = vmax.f32 %v1690, 0.0
    %v2473 = vmax.f32 %v1693, 0.0
    %v2474 = vmax.f32 %v1698, 0.0
    %v2475 = vmax.f32 %v1701, 0.0
    %v2476 = vmax.f32 %v1706, 0.0
    %v2477 = vmax.f32 %v1709, 0.0
    %v2478 = vmax.f32 %v1714, 0.0
    %v2479 = vmax.f32 %v1717, 0.0
    %v2480 = vmax.f32 %v1722, 0.0
    %v2481 = vmax.f32 %v1725, 0.0
    %v2482 = vmax.f32 %v1730, 0.0
    %v2483 = vmax.f32 %v1733, 0.0
    %v2484 = vmax.f32 %v1738, 0.0
    %v2485 = vmax.f32 %v1741, 0.0
    %v2486 = vmax.f32 %v1746, 0.0
    %v2487 = vmax.f32 %v1749, 0.0
    %v2488 = vmax.f32 %v1754, 0.0
    %v2489 = vmax.f32 %v1757, 0.0
    %v2490 = vmax.f32 %v1762, 0.0
    %v2491 = vmax.f32 %v1765, 0.0
    %v2492 = vmax.f32 %v1770, 0.0
    %v2493 = vmax.f32 %v1773, 0.0
    %v2494 = vmax.f32 %v1778, 0.0
    %v2495 = vmax.f32 %v1781, 0.0
    %v2496 = vmax.f32 %v1786, 0.0
    %v2497 = vmax.f32 %v1789, 0.0
    %v2498 = vmax.f32 %v1794, 0.0
    %v2499 = vmax.f32 %v1797, 0.0
    %v2500 = vmax.f32 %v1802, 0.0
    %v2501 = vmax.f32 %v1805, 0.0
    %v2502 = vmax.f32 %v1810, 0.0
    %v2503 = vmax.f32 %v1813, 0.0
    %v2504 = vmax.f32 %v1818, 0.0
    %v2505 = vmax.f32 %v1821, 0.0
    %v2506 = vmax.f32 %v1826, 0.0
    %v2507 = vmax.f32 %v1829, 0.0
    %v2508 = vmax.f32 %v1834, 0.0
    %v2509 = vmax.f32 %v1837, 0.0
    %v2510 = vmax.f32 %v1842, 0.0
    %v2511 = vmax.f32 %v1845, 0.0
    %v2512 = vmax.f32 %v1850, 0.0
    %v2513 = vmax.f32 %v1853, 0.0
    %v2514 = vmax.f32 %v1858, 0.0
    %v2515 = vmax.f32 %v1861, 0.0
    %v2516 = vmax.f32 %v1866, 0.0
    %v2517 = vmax.f32 %v1869, 0.0
    %v2518 = vmax.f32 %v1874, 0.0
    %v2519 = vmax.f32 %v1877, 0.0
    %v2520 = vmax.f32 %v1882, 0.0
    %v2521 = vmax.f32 %v1885, 0.0
    %v2522 = vmax.f32 %v1890, 0.0
    %v2523 = vmax.f32 %v1893, 0.0
    %v2524 = vmax.f32 %v1898, 0.0
    %v2525 = vmax.f32 %v1901, 0.0
    %v2526 = vmax.f32 %v1906, 0.0
    %v2527 = vmax.f32 %v1909, 0.0
    %v2528 = vmax.f32 %v1914, 0.0
    %v2529 = vmax.f32 %v1917, 0.0
    %v2530 = vmax.f32 %v1922, 0.0
    %v2531 = vmax.f32 %v1925, 0.0
    %v2532 = vmax.f32 %v1930, 0.0
    %v2533 = vmax.f32 %v1933, 0.0
    %v2534 = vmax.f32 %v1938, 0.0
    %v2535 = vmax.f32 %v1941, 0.0
    %v2536 = vmax.f32 %v1946, 0.0
    %v2537 = vmax.f32 %v1949, 0.0
    %v2538 = vmax.f32 %v1954, 0.0
    %v2539 = vmax.f32 %v1957, 0.0
    %v2540 = vmax.f32 %v1962, 0.0
    %v2541 = vmax.f32 %v1965, 0.0
    %v2542 = vmax.f32 %v1970, 0.0
    %v2543 = vmax.f32 %v1973, 0.0
    %v2544 = vmax.f32 %v1978, 0.0
    %v2545 = vmax.f32 %v1981, 0.0
    %v2546 = vmax.f32 %v1986, 0.0
    %v2547 = vmax.f32 %v1989, 0.0
    %v2548 = vmax.f32 %v1994, 0.0
    %v2549 = vmax.f32 %v1997, 0.0
    %v2550 = vmax.f32 %v2002, 0.0
    %v2551 = vmax.f32 %v2005, 0.0
    %v2552 = vmax.f32 %v2010, 0.0
    %v2553 = vmax.f32 %v2013, 0.0
    %v2554 = vmax.f32 %v2018, 0.0
    %v2555 = vmax.f32 %v2021, 0.0
    %v2556 = vmax.f32 %v2026, 0.0
    %v2557 = vmax.f32 %v2029, 0.0
    %v2558 = vmax.f32 %v2034, 0.0
    %v2559 = vmax.f32 %v2037, 0.0
    %v2560 = vmax.f32 %v2042, 0.0
    %v2561 = vmax.f32 %v2045, 0.0
    %v2562 = vmax.f32 %v2050, 0.0
    %v2563 = vmax.f32 %v2053, 0.0
    %v2564 = vmax.f32 %v2058, 0.0
    %v2565 = vmax.f32 %v2061, 0.0
    %v2566 = vmax.f32 %v2066, 0.0
    %v2567 = vmax.f32 %v2069, 0.0
    %v2568 = vmax.f32 %v2074, 0.0
    %v2569 = vmax.f32 %v2077, 0.0
    %v2570 = vmax.f32 %v2082, 0.0
    %v2571 = vmax.f32 %v2085, 0.0
    %v2572 = vmax.f32 %v2090, 0.0
    %v2573 = vmax.f32 %v2093, 0.0
    %v2574 = vmax.f32 %v2098, 0.0
    %v2575 = vmax.f32 %v2101, 0.0
    %v2576 = vmax.f32 %v2106, 0.0
    %v2577 = vmax.f32 %v2109, 0.0
    %v2578 = vmax.f32 %v2114, 0.0
    %v2579 = vmax.f32 %v2117, 0.0
    %v2580 = vmax.f32 %v2122, 0.0
    %v2581 = vmax.f32 %v2125, 0.0
    %v2582 = vmax.f32 %v2130, 0.0
    %v2583 = vmax.f32 %v2133, 0.0
    %v2584 = vmax.f32 %v2138, 0.0
    %v2585 = vmax.f32 %v2141, 0.0
    %v2586 = vmax.f32 %v2146, 0.0
    %v2587 = vmax.f32 %v2149, 0.0
    %v2588 = vmax.f32 %v2154, 0.0
    %v2589 = vmax.f32 %v2157, 0.0
    %v2590 = vmax.f32 %v2162, 0.0
    %v2591 = vmax.f32 %v2165, 0.0
    %v2592 = vmax.f32 %v2170, 0.0
    %v2593 = vmax.f32 %v2173, 0.0
    %v2594 = vmax.f32 %v2178, 0.0
    %v2595 = vmax.f32 %v2181, 0.0
    %v2596 = vmax.f32 %v2186, 0.0
    %v2597 = vmax.f32 %v2189, 0.0
    %v2598 = vmax.f32 %v2194, 0.0
    %v2599 = vmax.f32 %v2197, 0.0
    %v2600 = vmax.f32 %v2202, 0.0
    %v2601 = vmax.f32 %v2205, 0.0
    %v2602 = vmax.f32 %v2210, 0.0
    %v2603 = vmax.f32 %v2213, 0.0
    %v2604 = vmax.f32 %v2218, 0.0
    %v2605 = vmax.f32 %v2221, 0.0
    %v2606 = vmax.f32 %v2226, 0.0
    %v2607 = vmax.f32 %v2229, 0.0
    %v2608 = vmax.f32 %v2234, 0.0
    %v2609 = vmax.f32 %v2237, 0.0
    %v2610 = vmax.f32 %v2242, 0.0
    %v2611 = vmax.f32 %v2245, 0.0
    %v2612 = vmax.f32 %v2250, 0.0
    %v2613 = vmax.f32 %v2253, 0.0
    %v2614 = vmax.f32 %v2258, 0.0
    %v2615 = vmax.f32 %v2261, 0.0
    %v2616 = vmax.f32 %v2266, 0.0
    %v2617 = vmax.f32 %v2269, 0.0
    %v2618 = vmax.f32 %v2274, 0.0
    %v2619 = vmax.f32 %v2277, 0.0
    %v2620 = vmax.f32 %v2282, 0.0
    %v2621 = vmax.f32 %v2285, 0.0
    %v2622 = vmax.f32 %v2290, 0.0
    %v2623 = vmax.f32 %v2293, 0.0
    %v2624 = vmax.f32 %v2298, 0.0
    %v2625 = vmax.f32 %v2301, 0.0
    %v2626 = vmax.f32 %v2306, 0.0
    %v2627 = vmax.f32 %v2309, 0.0
    %v2628 = vmax.f32 %v2314, 0.0
    %v2629 = vmax.f32 %v2317, 0.0
    %v2630 = vmax.f32 %v2322, 0.0
    %v2631 = vmax.f32 %v2325, 0.0
    %v2632 = vmax.f32 %v2330, 0.0
    %v2633 = vmax.f32 %v2333, 0.0
    %v2634 = vmax.f32 %v2338, 0.0
    %v2635 = vmax.f32 %v2341, 0.0
    %v2636 = vmax.f32 %v2346, 0.0
    %v2637 = vmax.f32 %v2349, 0.0
    %v2638 = vmax.f32 %v2354, 0.0
    %v2639 = vmax.f32 %v2357, 0.0
    %v2640 = vmax.f32 %v2362, 0.0
    %v2641 = vmax.f32 %v2365, 0.0
    %v2642 = vmax.f32 %v2370, 0.0
    %v2643 = vmax.f32 %v2373, 0.0
    %v2644 = vmax.f32 %v2378, 0.0
    %v2645 = vmax.f32 %v2381, 0.0
    %v2646 = vmax.f32 %v2386, 0.0
    %v2647 = vmax.f32 %v2389, 0.0
    %v2648 = vsel %vm950, %v2392, 0.0
    %v2649 = vsel %vm950, %v2393, 0.0
    %v2650 = vadd.f32 %v2648, %v2649
    %v2651 = vsel %vm950, %v2394, 0.0
    %v2652 = vadd.f32 %v2650, %v2651
    %v2653 = vsel %vm950, %v2395, 0.0
    %v2654 = vadd.f32 %v2652, %v2653
    %v2655 = vsel %vm950, %v2396, 0.0
    %v2656 = vadd.f32 %v2654, %v2655
    %v2657 = vsel %vm950, %v2397, 0.0
    %v2658 = vadd.f32 %v2656, %v2657
    %v2659 = vsel %vm950, %v2398, 0.0
    %v2660 = vadd.f32 %v2658, %v2659
    %v2661 = vsel %vm950, %v2399, 0.0
    %v2662 = vadd.f32 %v2660, %v2661
    %v2663 = vsel %vm950, %v2400, 0.0
    %v2664 = vadd.f32 %v2662, %v2663
    %v2665 = vsel %vm950, %v2401, 0.0
    %v2666 = vadd.f32 %v2664, %v2665
    %v2667 = vsel %vm950, %v2402, 0.0
    %v2668 = vadd.f32 %v2666, %v2667
    %v2669 = vsel %vm950, %v2403, 0.0
    %v2670 = vadd.f32 %v2668, %v2669
    %v2671 = vsel %vm950, %v2404, 0.0
    %v2672 = vadd.f32 %v2670, %v2671
    %v2673 = vsel %vm950, %v2405, 0.0
    %v2674 = vadd.f32 %v2672, %v2673
    %v2675 = vsel %vm950, %v2406, 0.0
    %v2676 = vadd.f32 %v2674, %v2675
    %v2677 = vsel %vm950, %v2407, 0.0
    %v2678 = vadd.f32 %v2676, %v2677
    %v2679 = vsel %vm950, %v2408, 0.0
    %v2680 = vadd.f32 %v2678, %v2679
    %v2681 = vsel %vm950, %v2409, 0.0
    %v2682 = vadd.f32 %v2680, %v2681
    %v2683 = vsel %vm950, %v2410, 0.0
    %v2684 = vadd.f32 %v2682, %v2683
    %v2685 = vsel %vm950, %v2411, 0.0
    %v2686 = vadd.f32 %v2684, %v2685
    %v2687 = vsel %vm950, %v2412, 0.0
    %v2688 = vadd.f32 %v2686, %v2687
    %v2689 = vsel %vm950, %v2413, 0.0
    %v2690 = vadd.f32 %v2688, %v2689
    %v2691 = vsel %vm950, %v2414, 0.0
    %v2692 = vadd.f32 %v2690, %v2691
    %v2693 = vsel %vm950, %v2415, 0.0
    %v2694 = vadd.f32 %v2692, %v2693
    %v2695 = vsel %vm950, %v2416, 0.0
    %v2696 = vadd.f32 %v2694, %v2695
    %v2697 = vsel %vm950, %v2417, 0.0
    %v2698 = vadd.f32 %v2696, %v2697
    %v2699 = vsel %vm950, %v2418, 0.0
    %v2700 = vadd.f32 %v2698, %v2699
    %v2701 = vsel %vm950, %v2419, 0.0
    %v2702 = vadd.f32 %v2700, %v2701
    %v2703 = vsel %vm950, %v2420, 0.0
    %v2704 = vadd.f32 %v2702, %v2703
    %v2705 = vsel %vm950, %v2421, 0.0
    %v2706 = vadd.f32 %v2704, %v2705
    %v2707 = vsel %vm950, %v2422, 0.0
    %v2708 = vadd.f32 %v2706, %v2707
    %v2709 = vsel %vm950, %v2423, 0.0
    %v2710 = vadd.f32 %v2708, %v2709
    %v2711 = vrot.slane %v2710, 4
    %v2712 = vadd.f32 %v2710, %v2711
    %v2713 = vrot.slane %v2712, 2
    %v2714 = vadd.f32 %v2712, %v2713
    %v2715 = vrot.slane %v2714, 1
    %v2716 = vadd.f32 %v2714, %v2715
    %v2717 = vsel %vm950, %v2424, 0.0
    %v2718 = vsel %vm950, %v2425, 0.0
    %v2719 = vadd.f32 %v2717, %v2718
    %v2720 = vsel %vm950, %v2426, 0.0
    %v2721 = vadd.f32 %v2719, %v2720
    %v2722 = vsel %vm950, %v2427, 0.0
    %v2723 = vadd.f32 %v2721, %v2722
    %v2724 = vsel %vm950, %v2428, 0.0
    %v2725 = vadd.f32 %v2723, %v2724
    %v2726 = vsel %vm950, %v2429, 0.0
    %v2727 = vadd.f32 %v2725, %v2726
    %v2728 = vsel %vm950, %v2430, 0.0
    %v2729 = vadd.f32 %v2727, %v2728
    %v2730 = vsel %vm950, %v2431, 0.0
    %v2731 = vadd.f32 %v2729, %v2730
    %v2732 = vsel %vm950, %v2432, 0.0
    %v2733 = vadd.f32 %v2731, %v2732
    %v2734 = vsel %vm950, %v2433, 0.0
    %v2735 = vadd.f32 %v2733, %v2734
    %v2736 = vsel %vm950, %v2434, 0.0
    %v2737 = vadd.f32 %v2735, %v2736
    %v2738 = vsel %vm950, %v2435, 0.0
    %v2739 = vadd.f32 %v2737, %v2738
    %v2740 = vsel %vm950, %v2436, 0.0
    %v2741 = vadd.f32 %v2739, %v2740
    %v2742 = vsel %vm950, %v2437, 0.0
    %v2743 = vadd.f32 %v2741, %v2742
    %v2744 = vsel %vm950, %v2438, 0.0
    %v2745 = vadd.f32 %v2743, %v2744
    %v2746 = vsel %vm950, %v2439, 0.0
    %v2747 = vadd.f32 %v2745, %v2746
    %v2748 = vsel %vm950, %v2440, 0.0
    %v2749 = vadd.f32 %v2747, %v2748
    %v2750 = vsel %vm950, %v2441, 0.0
    %v2751 = vadd.f32 %v2749, %v2750
    %v2752 = vsel %vm950, %v2442, 0.0
    %v2753 = vadd.f32 %v2751, %v2752
    %v2754 = vsel %vm950, %v2443, 0.0
    %v2755 = vadd.f32 %v2753, %v2754
    %v2756 = vsel %vm950, %v2444, 0.0
    %v2757 = vadd.f32 %v2755, %v2756
    %v2758 = vsel %vm950, %v2445, 0.0
    %v2759 = vadd.f32 %v2757, %v2758
    %v2760 = vsel %vm950, %v2446, 0.0
    %v2761 = vadd.f32 %v2759, %v2760
    %v2762 = vsel %vm950, %v2447, 0.0
    %v2763 = vadd.f32 %v2761, %v2762
    %v2764 = vsel %vm950, %v2448, 0.0
    %v2765 = vadd.f32 %v2763, %v2764
    %v2766 = vsel %vm950, %v2449, 0.0
    %v2767 = vadd.f32 %v2765, %v2766
    %v2768 = vsel %vm950, %v2450, 0.0
    %v2769 = vadd.f32 %v2767, %v2768
    %v2770 = vsel %vm950, %v2451, 0.0
    %v2771 = vadd.f32 %v2769, %v2770
    %v2772 = vsel %vm950, %v2452, 0.0
    %v2773 = vadd.f32 %v2771, %v2772
    %v2774 = vsel %vm950, %v2453, 0.0
    %v2775 = vadd.f32 %v2773, %v2774
    %v2776 = vsel %vm950, %v2454, 0.0
    %v2777 = vadd.f32 %v2775, %v2776
    %v2778 = vsel %vm950, %v2455, 0.0
    %v2779 = vadd.f32 %v2777, %v2778
    %v2780 = vrot.slane %v2779, 4
    %v2781 = vadd.f32 %v2779, %v2780
    %v2782 = vrot.slane %v2781, 2
    %v2783 = vadd.f32 %v2781, %v2782
    %v2784 = vrot.slane %v2783, 1
    %v2785 = vadd.f32 %v2783, %v2784
    %v2786 = vsel %vm950, %v2456, 0.0
    %v2787 = vsel %vm950, %v2457, 0.0
    %v2788 = vadd.f32 %v2786, %v2787
    %v2789 = vsel %vm950, %v2458, 0.0
    %v2790 = vadd.f32 %v2788, %v2789
    %v2791 = vsel %vm950, %v2459, 0.0
    %v2792 = vadd.f32 %v2790, %v2791
    %v2793 = vsel %vm950, %v2460, 0.0
    %v2794 = vadd.f32 %v2792, %v2793
    %v2795 = vsel %vm950, %v2461, 0.0
    %v2796 = vadd.f32 %v2794, %v2795
    %v2797 = vsel %vm950, %v2462, 0.0
    %v2798 = vadd.f32 %v2796, %v2797
    %v2799 = vsel %vm950, %v2463, 0.0
    %v2800 = vadd.f32 %v2798, %v2799
    %v2801 = vsel %vm950, %v2464, 0.0
    %v2802 = vadd.f32 %v2800, %v2801
    %v2803 = vsel %vm950, %v2465, 0.0
    %v2804 = vadd.f32 %v2802, %v2803
    %v2805 = vsel %vm950, %v2466, 0.0
    %v2806 = vadd.f32 %v2804, %v2805
    %v2807 = vsel %vm950, %v2467, 0.0
    %v2808 = vadd.f32 %v2806, %v2807
    %v2809 = vsel %vm950, %v2468, 0.0
    %v2810 = vadd.f32 %v2808, %v2809
    %v2811 = vsel %vm950, %v2469, 0.0
    %v2812 = vadd.f32 %v2810, %v2811
    %v2813 = vsel %vm950, %v2470, 0.0
    %v2814 = vadd.f32 %v2812, %v2813
    %v2815 = vsel %vm950, %v2471, 0.0
    %v2816 = vadd.f32 %v2814, %v2815
    %v2817 = vsel %vm950, %v2472, 0.0
    %v2818 = vadd.f32 %v2816, %v2817
    %v2819 = vsel %vm950, %v2473, 0.0
    %v2820 = vadd.f32 %v2818, %v2819
    %v2821 = vsel %vm950, %v2474, 0.0
    %v2822 = vadd.f32 %v2820, %v2821
    %v2823 = vsel %vm950, %v2475, 0.0
    %v2824 = vadd.f32 %v2822, %v2823
    %v2825 = vsel %vm950, %v2476, 0.0
    %v2826 = vadd.f32 %v2824, %v2825
    %v2827 = vsel %vm950, %v2477, 0.0
    %v2828 = vadd.f32 %v2826, %v2827
    %v2829 = vsel %vm950, %v2478, 0.0
    %v2830 = vadd.f32 %v2828, %v2829
    %v2831 = vsel %vm950, %v2479, 0.0
    %v2832 = vadd.f32 %v2830, %v2831
    %v2833 = vsel %vm950, %v2480, 0.0
    %v2834 = vadd.f32 %v2832, %v2833
    %v2835 = vsel %vm950, %v2481, 0.0
    %v2836 = vadd.f32 %v2834, %v2835
    %v2837 = vsel %vm950, %v2482, 0.0
    %v2838 = vadd.f32 %v2836, %v2837
    %v2839 = vsel %vm950, %v2483, 0.0
    %v2840 = vadd.f32 %v2838, %v2839
    %v2841 = vsel %vm950, %v2484, 0.0
    %v2842 = vadd.f32 %v2840, %v2841
    %v2843 = vsel %vm950, %v2485, 0.0
    %v2844 = vadd.f32 %v2842, %v2843
    %v2845 = vsel %vm950, %v2486, 0.0
    %v2846 = vadd.f32 %v2844, %v2845
    %v2847 = vsel %vm950, %v2487, 0.0
    %v2848 = vadd.f32 %v2846, %v2847
    %v2849 = vrot.slane %v2848, 4
    %v2850 = vadd.f32 %v2848, %v2849
    %v2851 = vrot.slane %v2850, 2
    %v2852 = vadd.f32 %v2850, %v2851
    %v2853 = vrot.slane %v2852, 1
    %v2854 = vadd.f32 %v2852, %v2853
    %v2855 = vsel %vm950, %v2488, 0.0
    %v2856 = vsel %vm950, %v2489, 0.0
    %v2857 = vadd.f32 %v2855, %v2856
    %v2858 = vsel %vm950, %v2490, 0.0
    %v2859 = vadd.f32 %v2857, %v2858
    %v2860 = vsel %vm950, %v2491, 0.0
    %v2861 = vadd.f32 %v2859, %v2860
    %v2862 = vsel %vm950, %v2492, 0.0
    %v2863 = vadd.f32 %v2861, %v2862
    %v2864 = vsel %vm950, %v2493, 0.0
    %v2865 = vadd.f32 %v2863, %v2864
    %v2866 = vsel %vm950, %v2494, 0.0
    %v2867 = vadd.f32 %v2865, %v2866
    %v2868 = vsel %vm950, %v2495, 0.0
    %v2869 = vadd.f32 %v2867, %v2868
    %v2870 = vsel %vm950, %v2496, 0.0
    %v2871 = vadd.f32 %v2869, %v2870
    %v2872 = vsel %vm950, %v2497, 0.0
    %v2873 = vadd.f32 %v2871, %v2872
    %v2874 = vsel %vm950, %v2498, 0.0
    %v2875 = vadd.f32 %v2873, %v2874
    %v2876 = vsel %vm950, %v2499, 0.0
    %v2877 = vadd.f32 %v2875, %v2876
    %v2878 = vsel %vm950, %v2500, 0.0
    %v2879 = vadd.f32 %v2877, %v2878
    %v2880 = vsel %vm950, %v2501, 0.0
    %v2881 = vadd.f32 %v2879, %v2880
    %v2882 = vsel %vm950, %v2502, 0.0
    %v2883 = vadd.f32 %v2881, %v2882
    %v2884 = vsel %vm950, %v2503, 0.0
    %v2885 = vadd.f32 %v2883, %v2884
    %v2886 = vsel %vm950, %v2504, 0.0
    %v2887 = vadd.f32 %v2885, %v2886
    %v2888 = vsel %vm950, %v2505, 0.0
    %v2889 = vadd.f32 %v2887, %v2888
    %v2890 = vsel %vm950, %v2506, 0.0
    %v2891 = vadd.f32 %v2889, %v2890
    %v2892 = vsel %vm950, %v2507, 0.0
    %v2893 = vadd.f32 %v2891, %v2892
    %v2894 = vsel %vm950, %v2508, 0.0
    %v2895 = vadd.f32 %v2893, %v2894
    %v2896 = vsel %vm950, %v2509, 0.0
    %v2897 = vadd.f32 %v2895, %v2896
    %v2898 = vsel %vm950, %v2510, 0.0
    %v2899 = vadd.f32 %v2897, %v2898
    %v2900 = vsel %vm950, %v2511, 0.0
    %v2901 = vadd.f32 %v2899, %v2900
    %v2902 = vsel %vm950, %v2512, 0.0
    %v2903 = vadd.f32 %v2901, %v2902
    %v2904 = vsel %vm950, %v2513, 0.0
    %v2905 = vadd.f32 %v2903, %v2904
    %v2906 = vsel %vm950, %v2514, 0.0
    %v2907 = vadd.f32 %v2905, %v2906
    %v2908 = vsel %vm950, %v2515, 0.0
    %v2909 = vadd.f32 %v2907, %v2908
    %v2910 = vsel %vm950, %v2516, 0.0
    %v2911 = vadd.f32 %v2909, %v2910
    %v2912 = vsel %vm950, %v2517, 0.0
    %v2913 = vadd.f32 %v2911, %v2912
    %v2914 = vsel %vm950, %v2518, 0.0
    %v2915 = vadd.f32 %v2913, %v2914
    %v2916 = vsel %vm950, %v2519, 0.0
    %v2917 = vadd.f32 %v2915, %v2916
    %v2918 = vrot.slane %v2917, 4
    %v2919 = vadd.f32 %v2917, %v2918
    %v2920 = vrot.slane %v2919, 2
    %v2921 = vadd.f32 %v2919, %v2920
    %v2922 = vrot.slane %v2921, 1
    %v2923 = vadd.f32 %v2921, %v2922
    %v2924 = vsel %vm950, %v2520, 0.0
    %v2925 = vsel %vm950, %v2521, 0.0
    %v2926 = vadd.f32 %v2924, %v2925
    %v2927 = vsel %vm950, %v2522, 0.0
    %v2928 = vadd.f32 %v2926, %v2927
    %v2929 = vsel %vm950, %v2523, 0.0
    %v2930 = vadd.f32 %v2928, %v2929
    %v2931 = vsel %vm950, %v2524, 0.0
    %v2932 = vadd.f32 %v2930, %v2931
    %v2933 = vsel %vm950, %v2525, 0.0
    %v2934 = vadd.f32 %v2932, %v2933
    %v2935 = vsel %vm950, %v2526, 0.0
    %v2936 = vadd.f32 %v2934, %v2935
    %v2937 = vsel %vm950, %v2527, 0.0
    %v2938 = vadd.f32 %v2936, %v2937
    %v2939 = vsel %vm950, %v2528, 0.0
    %v2940 = vadd.f32 %v2938, %v2939
    %v2941 = vsel %vm950, %v2529, 0.0
    %v2942 = vadd.f32 %v2940, %v2941
    %v2943 = vsel %vm950, %v2530, 0.0
    %v2944 = vadd.f32 %v2942, %v2943
    %v2945 = vsel %vm950, %v2531, 0.0
    %v2946 = vadd.f32 %v2944, %v2945
    %v2947 = vsel %vm950, %v2532, 0.0
    %v2948 = vadd.f32 %v2946, %v2947
    %v2949 = vsel %vm950, %v2533, 0.0
    %v2950 = vadd.f32 %v2948, %v2949
    %v2951 = vsel %vm950, %v2534, 0.0
    %v2952 = vadd.f32 %v2950, %v2951
    %v2953 = vsel %vm950, %v2535, 0.0
    %v2954 = vadd.f32 %v2952, %v2953
    %v2955 = vsel %vm950, %v2536, 0.0
    %v2956 = vadd.f32 %v2954, %v2955
    %v2957 = vsel %vm950, %v2537, 0.0
    %v2958 = vadd.f32 %v2956, %v2957
    %v2959 = vsel %vm950, %v2538, 0.0
    %v2960 = vadd.f32 %v2958, %v2959
    %v2961 = vsel %vm950, %v2539, 0.0
    %v2962 = vadd.f32 %v2960, %v2961
    %v2963 = vsel %vm950, %v2540, 0.0
    %v2964 = vadd.f32 %v2962, %v2963
    %v2965 = vsel %vm950, %v2541, 0.0
    %v2966 = vadd.f32 %v2964, %v2965
    %v2967 = vsel %vm950, %v2542, 0.0
    %v2968 = vadd.f32 %v2966, %v2967
    %v2969 = vsel %vm950, %v2543, 0.0
    %v2970 = vadd.f32 %v2968, %v2969
    %v2971 = vsel %vm950, %v2544, 0.0
    %v2972 = vadd.f32 %v2970, %v2971
    %v2973 = vsel %vm950, %v2545, 0.0
    %v2974 = vadd.f32 %v2972, %v2973
    %v2975 = vsel %vm950, %v2546, 0.0
    %v2976 = vadd.f32 %v2974, %v2975
    %v2977 = vsel %vm950, %v2547, 0.0
    %v2978 = vadd.f32 %v2976, %v2977
    %v2979 = vsel %vm950, %v2548, 0.0
    %v2980 = vadd.f32 %v2978, %v2979
    %v2981 = vsel %vm950, %v2549, 0.0
    %v2982 = vadd.f32 %v2980, %v2981
    %v2983 = vsel %vm950, %v2550, 0.0
    %v2984 = vadd.f32 %v2982, %v2983
    %v2985 = vsel %vm950, %v2551, 0.0
    %v2986 = vadd.f32 %v2984, %v2985
    %v2987 = vrot.slane %v2986, 4
    %v2988 = vadd.f32 %v2986, %v2987
    %v2989 = vrot.slane %v2988, 2
    %v2990 = vadd.f32 %v2988, %v2989
    %v2991 = vrot.slane %v2990, 1
    %v2992 = vadd.f32 %v2990, %v2991
    %v2993 = vsel %vm950, %v2552, 0.0
    %v2994 = vsel %vm950, %v2553, 0.0
    %v2995 = vadd.f32 %v2993, %v2994
    %v2996 = vsel %vm950, %v2554, 0.0
    %v2997 = vadd.f32 %v2995, %v2996
    %v2998 = vsel %vm950, %v2555, 0.0
    %v2999 = vadd.f32 %v2997, %v2998
    %v3000 = vsel %vm950, %v2556, 0.0
    %v3001 = vadd.f32 %v2999, %v3000
    %v3002 = vsel %vm950, %v2557, 0.0
    %v3003 = vadd.f32 %v3001, %v3002
    %v3004 = vsel %vm950, %v2558, 0.0
    %v3005 = vadd.f32 %v3003, %v3004
    %v3006 = vsel %vm950, %v2559, 0.0
    %v3007 = vadd.f32 %v3005, %v3006
    %v3008 = vsel %vm950, %v2560, 0.0
    %v3009 = vadd.f32 %v3007, %v3008
    %v3010 = vsel %vm950, %v2561, 0.0
    %v3011 = vadd.f32 %v3009, %v3010
    %v3012 = vsel %vm950, %v2562, 0.0
    %v3013 = vadd.f32 %v3011, %v3012
    %v3014 = vsel %vm950, %v2563, 0.0
    %v3015 = vadd.f32 %v3013, %v3014
    %v3016 = vsel %vm950, %v2564, 0.0
    %v3017 = vadd.f32 %v3015, %v3016
    %v3018 = vsel %vm950, %v2565, 0.0
    %v3019 = vadd.f32 %v3017, %v3018
    %v3020 = vsel %vm950, %v2566, 0.0
    %v3021 = vadd.f32 %v3019, %v3020
    %v3022 = vsel %vm950, %v2567, 0.0
    %v3023 = vadd.f32 %v3021, %v3022
    %v3024 = vsel %vm950, %v2568, 0.0
    %v3025 = vadd.f32 %v3023, %v3024
    %v3026 = vsel %vm950, %v2569, 0.0
    %v3027 = vadd.f32 %v3025, %v3026
    %v3028 = vsel %vm950, %v2570, 0.0
    %v3029 = vadd.f32 %v3027, %v3028
    %v3030 = vsel %vm950, %v2571, 0.0
    %v3031 = vadd.f32 %v3029, %v3030
    %v3032 = vsel %vm950, %v2572, 0.0
    %v3033 = vadd.f32 %v3031, %v3032
    %v3034 = vsel %vm950, %v2573, 0.0
    %v3035 = vadd.f32 %v3033, %v3034
    %v3036 = vsel %vm950, %v2574, 0.0
    %v3037 = vadd.f32 %v3035, %v3036
    %v3038 = vsel %vm950, %v2575, 0.0
    %v3039 = vadd.f32 %v3037, %v3038
    %v3040 = vsel %vm950, %v2576, 0.0
    %v3041 = vadd.f32 %v3039, %v3040
    %v3042 = vsel %vm950, %v2577, 0.0
    %v3043 = vadd.f32 %v3041, %v3042
    %v3044 = vsel %vm950, %v2578, 0.0
    %v3045 = vadd.f32 %v3043, %v3044
    %v3046 = vsel %vm950, %v2579, 0.0
    %v3047 = vadd.f32 %v3045, %v3046
    %v3048 = vsel %vm950, %v2580, 0.0
    %v3049 = vadd.f32 %v3047, %v3048
    %v3050 = vsel %vm950, %v2581, 0.0
    %v3051 = vadd.f32 %v3049, %v3050
    %v3052 = vsel %vm950, %v2582, 0.0
    %v3053 = vadd.f32 %v3051, %v3052
    %v3054 = vsel %vm950, %v2583, 0.0
    %v3055 = vadd.f32 %v3053, %v3054
    %v3056 = vrot.slane %v3055, 4
    %v3057 = vadd.f32 %v3055, %v3056
    %v3058 = vrot.slane %v3057, 2
    %v3059 = vadd.f32 %v3057, %v3058
    %v3060 = vrot.slane %v3059, 1
    %v3061 = vadd.f32 %v3059, %v3060
    %v3062 = vsel %vm950, %v2584, 0.0
    %v3063 = vsel %vm950, %v2585, 0.0
    %v3064 = vadd.f32 %v3062, %v3063
    %v3065 = vsel %vm950, %v2586, 0.0
    %v3066 = vadd.f32 %v3064, %v3065
    %v3067 = vsel %vm950, %v2587, 0.0
    %v3068 = vadd.f32 %v3066, %v3067
    %v3069 = vsel %vm950, %v2588, 0.0
    %v3070 = vadd.f32 %v3068, %v3069
    %v3071 = vsel %vm950, %v2589, 0.0
    %v3072 = vadd.f32 %v3070, %v3071
    %v3073 = vsel %vm950, %v2590, 0.0
    %v3074 = vadd.f32 %v3072, %v3073
    %v3075 = vsel %vm950, %v2591, 0.0
    %v3076 = vadd.f32 %v3074, %v3075
    %v3077 = vsel %vm950, %v2592, 0.0
    %v3078 = vadd.f32 %v3076, %v3077
    %v3079 = vsel %vm950, %v2593, 0.0
    %v3080 = vadd.f32 %v3078, %v3079
    %v3081 = vsel %vm950, %v2594, 0.0
    %v3082 = vadd.f32 %v3080, %v3081
    %v3083 = vsel %vm950, %v2595, 0.0
    %v3084 = vadd.f32 %v3082, %v3083
    %v3085 = vsel %vm950, %v2596, 0.0
    %v3086 = vadd.f32 %v3084, %v3085
    %v3087 = vsel %vm950, %v2597, 0.0
    %v3088 = vadd.f32 %v3086, %v3087
    %v3089 = vsel %vm950, %v2598, 0.0
    %v3090 = vadd.f32 %v3088, %v3089
    %v3091 = vsel %vm950, %v2599, 0.0
    %v3092 = vadd.f32 %v3090, %v3091
    %v3093 = vsel %vm950, %v2600, 0.0
    %v3094 = vadd.f32 %v3092, %v3093
    %v3095 = vsel %vm950, %v2601, 0.0
    %v3096 = vadd.f32 %v3094, %v3095
    %v3097 = vsel %vm950, %v2602, 0.0
    %v3098 = vadd.f32 %v3096, %v3097
    %v3099 = vsel %vm950, %v2603, 0.0
    %v3100 = vadd.f32 %v3098, %v3099
    %v3101 = vsel %vm950, %v2604, 0.0
    %v3102 = vadd.f32 %v3100, %v3101
    %v3103 = vsel %vm950, %v2605, 0.0
    %v3104 = vadd.f32 %v3102, %v3103
    %v3105 = vsel %vm950, %v2606, 0.0
    %v3106 = vadd.f32 %v3104, %v3105
    %v3107 = vsel %vm950, %v2607, 0.0
    %v3108 = vadd.f32 %v3106, %v3107
    %v3109 = vsel %vm950, %v2608, 0.0
    %v3110 = vadd.f32 %v3108, %v3109
    %v3111 = vsel %vm950, %v2609, 0.0
    %v3112 = vadd.f32 %v3110, %v3111
    %v3113 = vsel %vm950, %v2610, 0.0
    %v3114 = vadd.f32 %v3112, %v3113
    %v3115 = vsel %vm950, %v2611, 0.0
    %v3116 = vadd.f32 %v3114, %v3115
    %v3117 = vsel %vm950, %v2612, 0.0
    %v3118 = vadd.f32 %v3116, %v3117
    %v3119 = vsel %vm950, %v2613, 0.0
    %v3120 = vadd.f32 %v3118, %v3119
    %v3121 = vsel %vm950, %v2614, 0.0
    %v3122 = vadd.f32 %v3120, %v3121
    %v3123 = vsel %vm950, %v2615, 0.0
    %v3124 = vadd.f32 %v3122, %v3123
    %v3125 = vrot.slane %v3124, 4
    %v3126 = vadd.f32 %v3124, %v3125
    %v3127 = vrot.slane %v3126, 2
    %v3128 = vadd.f32 %v3126, %v3127
    %v3129 = vrot.slane %v3128, 1
    %v3130 = vadd.f32 %v3128, %v3129
    %v3131 = vsel %vm950, %v2616, 0.0
    %v3132 = vsel %vm950, %v2617, 0.0
    %v3133 = vadd.f32 %v3131, %v3132
    %v3134 = vsel %vm950, %v2618, 0.0
    %v3135 = vadd.f32 %v3133, %v3134
    %v3136 = vsel %vm950, %v2619, 0.0
    %v3137 = vadd.f32 %v3135, %v3136
    %v3138 = vsel %vm950, %v2620, 0.0
    %v3139 = vadd.f32 %v3137, %v3138
    %v3140 = vsel %vm950, %v2621, 0.0
    %v3141 = vadd.f32 %v3139, %v3140
    %v3142 = vsel %vm950, %v2622, 0.0
    %v3143 = vadd.f32 %v3141, %v3142
    %v3144 = vsel %vm950, %v2623, 0.0
    %v3145 = vadd.f32 %v3143, %v3144
    %v3146 = vsel %vm950, %v2624, 0.0
    %v3147 = vadd.f32 %v3145, %v3146
    %v3148 = vsel %vm950, %v2625, 0.0
    %v3149 = vadd.f32 %v3147, %v3148
    %v3150 = vsel %vm950, %v2626, 0.0
    %v3151 = vadd.f32 %v3149, %v3150
    %v3152 = vsel %vm950, %v2627, 0.0
    %v3153 = vadd.f32 %v3151, %v3152
    %v3154 = vsel %vm950, %v2628, 0.0
    %v3155 = vadd.f32 %v3153, %v3154
    %v3156 = vsel %vm950, %v2629, 0.0
    %v3157 = vadd.f32 %v3155, %v3156
    %v3158 = vsel %vm950, %v2630, 0.0
    %v3159 = vadd.f32 %v3157, %v3158
    %v3160 = vsel %vm950, %v2631, 0.0
    %v3161 = vadd.f32 %v3159, %v3160
    %v3162 = vsel %vm950, %v2632, 0.0
    %v3163 = vadd.f32 %v3161, %v3162
    %v3164 = vsel %vm950, %v2633, 0.0
    %v3165 = vadd.f32 %v3163, %v3164
    %v3166 = vsel %vm950, %v2634, 0.0
    %v3167 = vadd.f32 %v3165, %v3166
    %v3168 = vsel %vm950, %v2635, 0.0
    %v3169 = vadd.f32 %v3167, %v3168
    %v3170 = vsel %vm950, %v2636, 0.0
    %v3171 = vadd.f32 %v3169, %v3170
    %v3172 = vsel %vm950, %v2637, 0.0
    %v3173 = vadd.f32 %v3171, %v3172
    %v3174 = vsel %vm950, %v2638, 0.0
    %v3175 = vadd.f32 %v3173, %v3174
    %v3176 = vsel %vm950, %v2639, 0.0
    %v3177 = vadd.f32 %v3175, %v3176
    %v3178 = vsel %vm950, %v2640, 0.0
    %v3179 = vadd.f32 %v3177, %v3178
    %v3180 = vsel %vm950, %v2641, 0.0
    %v3181 = vadd.f32 %v3179, %v3180
    %v3182 = vsel %vm950, %v2642, 0.0
    %v3183 = vadd.f32 %v3181, %v3182
    %v3184 = vsel %vm950, %v2643, 0.0
    %v3185 = vadd.f32 %v3183, %v3184
    %v3186 = vsel %vm950, %v2644, 0.0
    %v3187 = vadd.f32 %v3185, %v3186
    %v3188 = vsel %vm950, %v2645, 0.0
    %v3189 = vadd.f32 %v3187, %v3188
    %v3190 = vsel %vm950, %v2646, 0.0
    %v3191 = vadd.f32 %v3189, %v3190
    %v3192 = vsel %vm950, %v2647, 0.0
    %v3193 = vadd.f32 %v3191, %v3192
    %v3194 = vrot.slane %v3193, 4
    %v3195 = vadd.f32 %v3193, %v3194
    %v3196 = vrot.slane %v3195, 2
    %v3197 = vadd.f32 %v3195, %v3196
    %v3198 = vrot.slane %v3197, 1
    %v3199 = vadd.f32 %v3197, %v3198
    %v3200 = vmul.f32 %v2716, 0.00390625
    %v3201 = vmul.f32 %v2785, 0.00390625
    %v3202 = vmul.f32 %v2854, 0.00390625
    %v3203 = vmul.f32 %v2923, 0.00390625
    %v3204 = vmul.f32 %v2992, 0.00390625
    %v3205 = vmul.f32 %v3061, 0.00390625
    %v3206 = vmul.f32 %v3130, 0.00390625
    %v3207 = vmul.f32 %v3199, 0.00390625
    %v3208 = vld [vmem:[%s3] sm:$0xff]
    %v3209 = vld [vmem:[%s3 + $0x8] sm:$0xff]
    %v3210 = vld [vmem:[%s3 + $0x10] sm:$0xff]
    %v3211 = vld [vmem:[%s3 + $0x18] sm:$0xff]
    %v3212 = vld [vmem:[%s3 + $0x20] sm:$0xff]
    %v3213 = vld [vmem:[%s3 + $0x28] sm:$0xff]
    %v3214 = vld [vmem:[%s3 + $0x30] sm:$0xff]
    %v3215 = vld [vmem:[%s3 + $0x38] sm:$0xff]
    %v3216 = vld [vmem:[%s4] sm:$0x3]
    %v3218 = vlaneseq
    %v3219 = vshrl.u32 %v3218, 7
    %v3220 = vsub.s32 0, %v3219
    %v3221 = vrot.slane %v3216, %v3220
    %v3222 = vlaneseq
    %v3223 = vshrl.u32 %v3222, 7
    %v3224 = vsub.s32 1, %v3223
    %v3225 = vrot.slane %v3216, %v3224
    %vm3236 = vcmask 1041409
    %v3237 = vsel %vm3236, %v3201, %v3200
    %vm3238 = vcmask 1042434
    %v3239 = vsel %vm3238, %v3202, %v3237
    %vm3240 = vcmask 1043459
    %v3241 = vsel %vm3240, %v3203, %v3239
    %vm3242 = vcmask 1044484
    %v3243 = vsel %vm3242, %v3204, %v3241
    %vm3244 = vcmask 1045509
    %v3245 = vsel %vm3244, %v3205, %v3243
    %vm3246 = vcmask 1046534
    %v3247 = vsel %vm3246, %v3206, %v3245
    %vm3248 = vcmask 1047559
    %v3249 = vsel %vm3248, %v3207, %v3247
    %v3250 = vsel %vm950, %v3249, 0
    %3252 = vmatprep.subr.mxu0 0.0
    %3253 = vmatpush1.msra.mxu0 0.0
    %3254 = vmatprep.subr.mxu0 0.0
    %3255 = vmatpush1.msra.mxu0 0.0
    %3256 = vmatprep.subr.mxu0 0.0
    %3257 = vmatpush1.msra.mxu0 0.0
    %3258 = vmatprep.subr.mxu0 0.0
    %3259 = vmatpush1.msra.mxu0 0.0
    %3260 = vmatprep.subr.mxu0 0.0
    %3261 = vmatpush1.msra.mxu0 0.0
    %3262 = vmatprep.subr.mxu0 0.0
    %3263 = vmatpush1.msra.mxu0 0.0
    %3264 = vmatprep.subr.mxu0 0.0
    %3265 = vmatpush1.msra.mxu0 0.0
    %3266 = vmatprep.subr.mxu0 0.0
    %3267 = vmatpush1.msra.mxu0 0.0
    %3268 = vmatprep.subr.mxu0 0.0
    %3269 = vmatpush1.msra.mxu0 0.0
    %3270 = vmatprep.subr.mxu0 0.0
    %3271 = vmatpush1.msra.mxu0 0.0
    %3272 = vmatprep.subr.mxu0 0.0
    %3273 = vmatpush1.msra.mxu0 0.0
    %3274 = vmatprep.subr.mxu0 0.0
    %3275 = vmatpush1.msra.mxu0 0.0
    %3276 = vmatprep.subr.mxu0 %v3215
    %3277 = vmatpush1.msra.mxu0 %v3214
    %3278 = vmatprep.subr.mxu0 %v3213
    %3279 = vmatpush1.msra.mxu0 %v3212
    %3280 = vmatprep.subr.mxu0 %v3211
    %3281 = vmatpush1.msra.mxu0 %v3210
    %3282 = vmatprep.subr.mxu0 %v3209
    %3283 = vmatpush1.msra.mxu0 %v3208
    %3284 = vmatprep.subr.mxu0 0.0
    %3285 = vmatpush2.msra.mxu0 0.0
    %3286 = vmatprep.subr.mxu0 0.0
    %3287 = vmatpush2.msra.mxu0 0.0
    %3288 = vmatprep.subr.mxu0 0.0
    %3289 = vmatpush2.msra.mxu0 0.0
    %3290 = vmatprep.subr.mxu0 0.0
    %3291 = vmatpush2.msra.mxu0 0.0
    %3292 = vmatprep.subr.mxu0 0.0
    %3293 = vmatpush2.msra.mxu0 0.0
    %3294 = vmatprep.subr.mxu0 0.0
    %3295 = vmatpush2.msra.mxu0 0.0
    %3296 = vmatprep.subr.mxu0 0.0
    %3297 = vmatpush2.msra.mxu0 0.0
    %3298 = vmatprep.subr.mxu0 0.0
    %3299 = vmatpush2.msra.mxu0 0.0
    %3300 = vmatprep.subr.mxu0 0.0
    %3301 = vmatpush2.msra.mxu0 0.0
    %3302 = vmatprep.subr.mxu0 0.0
    %3303 = vmatpush2.msra.mxu0 0.0
    %3304 = vmatprep.subr.mxu0 0.0
    %3305 = vmatpush2.msra.mxu0 0.0
    %3306 = vmatprep.subr.mxu0 0.0
    %3307 = vmatpush2.msra.mxu0 0.0
    %3308 = vmatprep.subr.mxu0 0.0
    %3309 = vmatpush2.msra.mxu0 0.0
    %3310 = vmatprep.subr.mxu0 0.0
    %3311 = vmatpush2.msra.mxu0 0.0
    %3312 = vmatprep.subr.mxu0 0.0
    %3313 = vmatpush2.msra.mxu0 0.0
    %3314 = vmatprep.subr.mxu0 0.0
    %3315 = vmatpush2.msra.mxu0 0.0
    %3316 = vmatprep.mubr.f32.mxu0 0.0
    %3317 = vmatmul.mubr.f32.gmra.mxu0 %v3250
    %v3318 = vpop.f32.mrf.mxu0
    %v3319 = vadd.f32 %v3221, %v3318
    %v3320 = vpop.f32.mrf.mxu0
    %v3321 = vadd.f32 %v3225, %v3320
    %3322 = vdwg.mxu0
    %3323 = vst [vmem:[#allocation2] sm:$0xff] %v3319
    %v3324 = vmax.f32 %v3321, 0.0
    %v3325 = vld [vmem:[%s5] sm:$0xff]
    %v3326 = vld [vmem:[%s5 + $0x8] sm:$0xff]
    %v3327 = vld [vmem:[%s5 + $0x10] sm:$0xff]
    %v3328 = vld [vmem:[%s5 + $0x18] sm:$0xff]
    %v3329 = vld [vmem:[%s6] sm:$0x1]
    %v3331 = vlaneseq
    %v3332 = vshrl.u32 %v3331, 7
    %v3333 = vsub.s32 0, %v3332
    %v3334 = vrot.slane %v3329, %v3333
    %v3337 = vsel %vm950, %v3324, 0
    %3339 = vmatprep.subr.mxu0 0.0
    %3340 = vmatpush1.msra.mxu0 0.0
    %3341 = vmatprep.subr.mxu0 0.0
    %3342 = vmatpush1.msra.mxu0 0.0
    %3343 = vmatprep.subr.mxu0 0.0
    %3344 = vmatpush1.msra.mxu0 0.0
    %3345 = vmatprep.subr.mxu0 0.0
    %3346 = vmatpush1.msra.mxu0 0.0
    %3347 = vmatprep.subr.mxu0 0.0
    %3348 = vmatpush1.msra.mxu0 0.0
    %3349 = vmatprep.subr.mxu0 0.0
    %3350 = vmatpush1.msra.mxu0 0.0
    %3351 = vmatprep.subr.mxu0 0.0
    %3352 = vmatpush1.msra.mxu0 0.0
    %3353 = vmatprep.subr.mxu0 0.0
    %3354 = vmatpush1.msra.mxu0 0.0
    %3355 = vmatprep.subr.mxu0 0.0
    %3356 = vmatpush1.msra.mxu0 0.0
    %3357 = vmatprep.subr.mxu0 0.0
    %3358 = vmatpush1.msra.mxu0 0.0
    %3359 = vmatprep.subr.mxu0 0.0
    %3360 = vmatpush1.msra.mxu0 0.0
    %3361 = vmatprep.subr.mxu0 0.0
    %3362 = vmatpush1.msra.mxu0 0.0
    %3363 = vmatprep.subr.mxu0 0.0
    %3364 = vmatpush1.msra.mxu0 %v3328
    %3365 = vmatprep.subr.mxu0 0.0
    %3366 = vmatpush1.msra.mxu0 %v3327
    %3367 = vmatprep.subr.mxu0 0.0
    %3368 = vmatpush1.msra.mxu0 %v3326
    %3369 = vmatprep.subr.mxu0 0.0
    %3370 = vmatpush1.msra.mxu0 %v3325
    %3371 = vmatprep.subr.mxu0 0.0
    %3372 = vmatpush2.msra.mxu0 0.0
    %3373 = vmatprep.subr.mxu0 0.0
    %3374 = vmatpush2.msra.mxu0 0.0
    %3375 = vmatprep.subr.mxu0 0.0
    %3376 = vmatpush2.msra.mxu0 0.0
    %3377 = vmatprep.subr.mxu0 0.0
    %3378 = vmatpush2.msra.mxu0 0.0
    %3379 = vmatprep.subr.mxu0 0.0
    %3380 = vmatpush2.msra.mxu0 0.0
    %3381 = vmatprep.subr.mxu0 0.0
    %3382 = vmatpush2.msra.mxu0 0.0
    %3383 = vmatprep.subr.mxu0 0.0
    %3384 = vmatpush2.msra.mxu0 0.0
    %3385 = vmatprep.subr.mxu0 0.0
    %3386 = vmatpush2.msra.mxu0 0.0
    %3387 = vmatprep.subr.mxu0 0.0
    %3388 = vmatpush2.msra.mxu0 0.0
    %3389 = vmatprep.subr.mxu0 0.0
    %3390 = vmatpush2.msra.mxu0 0.0
    %3391 = vmatprep.subr.mxu0 0.0
    %3392 = vmatpush2.msra.mxu0 0.0
    %3393 = vmatprep.subr.mxu0 0.0
    %3394 = vmatpush2.msra.mxu0 0.0
    %3395 = vmatprep.subr.mxu0 0.0
    %3396 = vmatpush2.msra.mxu0 0.0
    %3397 = vmatprep.subr.mxu0 0.0
    %3398 = vmatpush2.msra.mxu0 0.0
    %3399 = vmatprep.subr.mxu0 0.0
    %3400 = vmatpush2.msra.mxu0 0.0
    %3401 = vmatprep.subr.mxu0 0.0
    %3402 = vmatpush2.msra.mxu0 0.0
    %3403 = vmatprep.mubr.f32.mxu0 0.0
    %3404 = vmatmul.mubr.f32.gmra.mxu0 %v3337
    %v3405 = vpop.f32.mrf.mxu0
    %v3406 = vadd.f32 %v3334, %v3405
    %v3407 = vpop.f32.mrf.mxu0
    %3408 = vdwg.mxu0
    %v3409 = vmul.f32 %v3406, %v3406
    %3410 = vadd.xlane.f32.xlu0 %v3409
    %v3411 = vpop.xlane.xlu0 %3410
    %v3412 = vmax.f32 %v3411, 1e-24
    %v3413 = vrsqrt.pop %v3412
    %v3414 = vmul.f32 %v3406, %v3413
    %3415 = vst [vmem:[#allocation4] sm:$0xff] %v3414
    // Predicated region
    $region30: #{tpu_custom_call.1} parent=1 // pred_check
      _
    $region31: #{tpu_custom_call.1} parent=1 // pred_check_branch
      %3417 = sbr.rel (0) target = $region33
    $region32: #{tpu_custom_call.1} parent=1 // pred_region
      %s3419 = ssub.s32 128, 128
      %3420 = vsyncadd [#allocation3], %s3419
      %s3422 = sshll.u32 [#allocation2], 4
      %s3423 = int_to_ptr.vmem [resolvable:$true] %s3422
      %3425 = dma.vmem_to_hbm [thread:$0]  %s3423, 128, %s7, [#allocation3]
    $region33: #{tpu_custom_call.1} parent=1 // pred_fallthru
      _
    // Predicated region
    $region34: #{tpu_custom_call.1} parent=1 // pred_check
      _
    $region35: #{tpu_custom_call.1} parent=1 // pred_check_branch
      %3427 = sbr.rel (0) target = $region37
    $region36: #{tpu_custom_call.1} parent=1 // pred_region
      %s3429 = ssub.s32 128, 128
      %3430 = vsyncadd [#allocation5], %s3429
      %s3432 = sshll.u32 [#allocation4], 4
      %s3433 = int_to_ptr.vmem [resolvable:$true] %s3432
      %3435 = dma.vmem_to_hbm [thread:$0]  %s3433, 128, %s8, [#allocation5]
    $region37: #{tpu_custom_call.1} parent=1 // pred_fallthru
      _
    // Predicated region
    $region38: #{tpu_custom_call.1} parent=1 // pred_check
      _
    $region39: #{tpu_custom_call.1} parent=1 // pred_check_branch
      %3437 = sbr.rel (0) target = $region41
    $region40: #{tpu_custom_call.1} parent=1 // pred_region
      %3438 = dma.done [#allocation3], 128
    $region41: #{tpu_custom_call.1} parent=1 // pred_fallthru
      _
    // Predicated region
    $region42: #{tpu_custom_call.1} parent=1 // pred_check
      _
    $region43: #{tpu_custom_call.1} parent=1 // pred_check_branch
      %3440 = sbr.rel (0) target = $region45
    $region44: #{tpu_custom_call.1} parent=1 // pred_region
      %3441 = dma.done [#allocation5], 128
    $region45: #{tpu_custom_call.1} parent=1 // pred_fallthru
      _
    %3442 = vsyncpa [#allocation3], 1
    %3443 = vsyncpa [#allocation5], 1

</llo_original>
